<compile_context>
chip_gen: v7x
topology: tpu7x:2x2x1
jax: 0.10.0
libtpu: 0.0.40
codegen_flags: <defaults>
</compile_context>

<pallas_src>
import functools
import math

import jax
import jax.numpy as jnp
import numpy as np
from jax.experimental import pallas as pl
from jax.experimental.pallas import tpu as pltpu


def _mha_kernel(q_ref, k_ref, v_ref, wqkv_ref, bqkv_ref, wo_ref, bo_ref,
                o_ref, kproj_ref, vproj_ref, *, head, d_k):
    """One (batch, query-tile) grid step.

    q_ref    : (1, TQ, D) f32   query activations (this tile)
    k_ref    : (1, L,  D) f32   key activations (full sequence, this batch)
    v_ref    : (1, L,  D) f32   value activations
    wqkv_ref : (3, H, D, d_k) bf16  head-major projection weights [Wq, Wk, Wv]
    bqkv_ref : (3, H, 1, d_k) f32   head-major projection biases
    wo_ref   : (H, d_k, D) bf16     head-major output projection weight
    bo_ref   : (1, D) f32           output projection bias
    o_ref    : (1, TQ, D)           output tile
    kproj_ref, vproj_ref : (H, L, d_k) bf16 persistent scratch (projected K/V)
    """
    scale = 1.0 / math.sqrt(d_k)
    tq, d_model = q_ref.shape[1], q_ref.shape[2]
    seq_len = k_ref.shape[1]

    # ---- K/V projection: only at the first query tile of each batch element.
    # Results live in persistent VMEM scratch (bf16) and are reused by all the
    # remaining query tiles of this batch -> no recomputed (L,D)@(D,D) matmuls.
    @pl.when(pl.program_id(1) == 0)
    def _():
        xk = jnp.broadcast_to(k_ref[0].astype(jnp.bfloat16),
                              (head, seq_len, d_model))
        xv = jnp.broadcast_to(v_ref[0].astype(jnp.bfloat16),
                              (head, seq_len, d_model))
        kh = jnp.einsum("hld,hdc->hlc", xk, wqkv_ref[1],
                        preferred_element_type=jnp.float32) + bqkv_ref[1]
        vh = jnp.einsum("hld,hdc->hlc", xv, wqkv_ref[2],
                        preferred_element_type=jnp.float32) + bqkv_ref[2]
        kproj_ref[...] = kh.astype(jnp.bfloat16)   # short f32 live range
        vproj_ref[...] = vh.astype(jnp.bfloat16)

    # ---- Q projection for this tile (1/sqrt(d_k) folded into Q once). -------
    xq = jnp.broadcast_to(q_ref[0].astype(jnp.bfloat16), (head, tq, d_model))
    qh = (jnp.einsum("hqd,hdc->hqc", xq, wqkv_ref[0],
                     preferred_element_type=jnp.float32) + bqkv_ref[0]) * scale
    qh = qh.astype(jnp.bfloat16)                       # (H, TQ, d_k)

    kh = kproj_ref[...]                                # (H, L, d_k) bf16
    vh = vproj_ref[...]                                # (H, L, d_k) bf16

    # ---- Attention core, batched over heads (no per-head unrolled loop). ----
    scores = jnp.einsum("hqc,hlc->hql", qh, kh,
                        preferred_element_type=jnp.float32)      # (H, TQ, L) f32
    m = jnp.max(scores, axis=-1, keepdims=True)
    e = jnp.exp(scores - m)                                      # f32 (portable)
    p = e * pl.reciprocal(jnp.sum(e, axis=-1, keepdims=True), approx=True)
    ctx = jnp.einsum("hql,hlc->hqc", p.astype(jnp.bfloat16), vh,
                     preferred_element_type=jnp.float32)         # (H, TQ, d_k)

    # ---- Output projection: head-batched matmul, reduced over heads. --------
    outh = jnp.einsum("hqc,hcd->hqd", ctx.astype(jnp.bfloat16), wo_ref[...],
                      preferred_element_type=jnp.float32)        # (H, TQ, D)
    out = jnp.sum(outh, axis=0) + bo_ref[...]                    # (TQ, D) f32
    o_ref[0] = out.astype(o_ref.dtype)                           # lane-dense store


def multi_headed_attention(q, k, v, params, *, head, q_tile=256):
    """q, k, v: [B, L, D] float32.  params: f32 weights stored [in, out]."""
    B, L, D = q.shape
    assert D % head == 0
    d_k = D // head
    out_dtype = q.dtype   # keep f32 output to match the PyTorch module

    # Host-side, one-time layout plumbing: head-major weights so the kernel
    # never splits the lane dimension into heads.
    def w_heads(w):                       # (D, D) -> (H, D, d_k)
        return w.reshape(D, head, d_k).transpose(1, 0, 2)

    def b_heads(b):                       # (1, D) -> (H, 1, d_k)
        return b.reshape(head, d_k)[:, None, :]

    wqkv = jnp.stack([w_heads(params["wq"]), w_heads(params["wk"]),
                      w_heads(params["wv"])]).astype(jnp.bfloat16)   # (3,H,D,d_k)
    bqkv = jnp.stack([b_heads(params["bq"]), b_heads(params["bk"]),
                      b_heads(params["bv"])])                        # (3,H,1,d_k) f32
    wo = params["wo"].reshape(head, d_k, D).astype(jnp.bfloat16)     # (H,d_k,D)
    bo = params["bo"]                                                # (1,D) f32

    # Query tiling; K/V projections persist in VMEM scratch across query tiles.
    # q_tile should be re-derived per generation (~128 on v7x, 384-512 on v6e).
    tq = min(q_tile, L)
    assert L % tq == 0, "L must be divisible by the query tile size"
    n_q = L // tq

    kernel = functools.partial(_mha_kernel, head=head, d_k=d_k)

    return pl.pallas_call(
        kernel,
        out_shape=jax.ShapeDtypeStruct((B, L, D), out_dtype),
        grid_spec=pltpu.PrefetchScalarGridSpec(
            num_scalar_prefetch=0,
            grid=(B, n_q),
            in_specs=[
                pl.BlockSpec((1, tq, D), lambda b, i: (b, i, 0)),            # q
                pl.BlockSpec((1, L, D), lambda b, i: (b, 0, 0)),             # k
                pl.BlockSpec((1, L, D), lambda b, i: (b, 0, 0)),             # v
                pl.BlockSpec((3, head, D, d_k), lambda b, i: (0, 0, 0, 0)),  # Wqkv
                pl.BlockSpec((3, head, 1, d_k), lambda b, i: (0, 0, 0, 0)),  # bqkv
                pl.BlockSpec((head, d_k, D), lambda b, i: (0, 0, 0)),        # Wo
                pl.BlockSpec((1, D), lambda b, i: (0, 0)),                   # bo
            ],
            out_specs=pl.BlockSpec((1, tq, D), lambda b, i: (b, i, 0)),
            scratch_shapes=[
                pltpu.VMEM((head, L, d_k), jnp.bfloat16),   # projected K (persistent)
                pltpu.VMEM((head, L, d_k), jnp.bfloat16),   # projected V (persistent)
            ],
        ),
        compiler_params=pltpu.CompilerParams(
            dimension_semantics=("parallel", "arbitrary"),
            # 48 MiB works on all generations (v7x has 64 MiB physical VMEM).
            vmem_limit_bytes=48 * 1024 * 1024,
        ),
    )(q, k, v, wqkv, bqkv, wo, bo)


def _reference(q, k, v, params, *, head):
    """Pure-JAX f32 reference mirroring the PyTorch forward (eval mode, no mask)."""
    B, L, D = q.shape
    d_k = D // head

    def lin(x, w, b):
        return x @ w + b[0]

    def split_heads(x):
        return x.reshape(B, L, head, d_k).transpose(0, 2, 1, 3)   # (B, H, L, d_k)

    Q = split_heads(lin(q, params["wq"], params["bq"]))
    K = split_heads(lin(k, params["wk"], params["bk"]))
    V = split_heads(lin(v, params["wv"], params["bv"]))

    scores = jnp.einsum("bhqd,bhkd->bhqk", Q, K) / math.sqrt(d_k)
    p = jax.nn.softmax(scores, axis=-1)
    ctx = jnp.einsum("bhqk,bhkd->bhqd", p, V)
    ctx = ctx.transpose(0, 2, 1, 3).reshape(B, L, D)
    return lin(ctx, params["wo"], params["bo"])


def _init_params(key, d_model):
    """Deterministic init; weights stored as [in, out] (pre-transposed vs nn.Linear)."""
    keys = jax.random.split(key, 8)
    bound = 1.0 / math.sqrt(d_model)

    def w(kk):
        return jax.random.uniform(kk, (d_model, d_model), jnp.float32, -bound, bound)

    def b(kk):
        return jax.random.uniform(kk, (1, d_model), jnp.float32, -bound, bound)

    return {
        "wq": w(keys[0]), "bq": b(keys[1]),
        "wk": w(keys[2]), "bk": b(keys[3]),
        "wv": w(keys[4]), "bv": b(keys[5]),
        "wo": w(keys[6]), "bo": b(keys[7]),
    }


if __name__ == "__main__":
    # Small lane-dense shapes: batch=2, seq=8, d_model=128, heads=4 (d_k=32).
    B, L, D, H = 2, 8, 128, 4

    key = jax.random.PRNGKey(0)
    kq, kk, kv, kp = jax.random.split(key, 4)
    q = jax.random.normal(kq, (B, L, D), jnp.float32)
    k = jax.random.normal(kk, (B, L, D), jnp.float32)
    v = jax.random.normal(kv, (B, L, D), jnp.float32)
    params = _init_params(kp, D)

    out = multi_headed_attention(q, k, v, params, head=H)
    out = jax.block_until_ready(out)

    ref = _reference(q, k, v, params, head=H)
    # bf16 MXU operands (f32 accumulation) + approx reciprocal vs pure-f32 ref.
    np.testing.assert_allclose(np.asarray(out), np.asarray(ref),
                               rtol=5e-2, atol=5e-2)

    print("KERNEL_OK")
</pallas_src>

<mosaic_0001>
module attributes {stable_mosaic.version = 11 : i64} {
  func.func @_mha_kernel(%arg0: i32, %arg1: i32, %arg2: memref<1x8x128xf32, #tpu.memory_space<vmem>>, %arg3: memref<1x8x128xf32, #tpu.memory_space<vmem>>, %arg4: memref<1x8x128xf32, #tpu.memory_space<vmem>>, %arg5: memref<3x4x128x32xbf16, #tpu.memory_space<vmem>>, %arg6: memref<3x4x1x32xf32, #tpu.memory_space<vmem>>, %arg7: memref<4x32x128xbf16, #tpu.memory_space<vmem>>, %arg8: memref<1x128xf32, #tpu.memory_space<vmem>>, %arg9: memref<1x8x128xf32, #tpu.memory_space<vmem>>, %arg10: memref<4x8x32xbf16, #tpu.memory_space<vmem>>, %arg11: memref<4x8x32xbf16, #tpu.memory_space<vmem>>) attributes {dimension_semantics = [#tpu.dimension_semantics<parallel>, #tpu.dimension_semantics<arbitrary>], iteration_bounds = array<i64: 2, 1>, scalar_prefetch = 0 : i64, scratch_operands = 2 : i64, tpu.core_type = #tpu.core_type<tc>, window_params = [{transform_indices = @transform_0, window_bounds = array<i64: 1, 8, 128>}, {transform_indices = @transform_1, window_bounds = array<i64: 1, 8, 128>}, {transform_indices = @transform_2, window_bounds = array<i64: 1, 8, 128>}, {pipeline_mode = #tpu.pipeline_mode<synchronous>, transform_indices = @transform_3, window_bounds = array<i64: 3, 4, 128, 32>}, {pipeline_mode = #tpu.pipeline_mode<synchronous>, transform_indices = @transform_4, window_bounds = array<i64: 3, 4, 1, 32>}, {pipeline_mode = #tpu.pipeline_mode<synchronous>, transform_indices = @transform_5, window_bounds = array<i64: 4, 32, 128>}, {pipeline_mode = #tpu.pipeline_mode<synchronous>, transform_indices = @transform_6, window_bounds = array<i64: 1, 128>}, {transform_indices = @transform_7, window_bounds = array<i64: 1, 8, 128>}]} {
    %c0_i32 = arith.constant 0 : i32
    %0 = arith.cmpi eq, %arg1, %c0_i32 : i32
    %1 = arith.extui %0 : i1 to i32
    %c0_i32_0 = arith.constant 0 : i32
    %2 = arith.cmpi ne, %1, %c0_i32_0 : i32
    scf.if %2 {
      %c0_32 = arith.constant 0 : index
      %c0_33 = arith.constant 0 : index
      %c0_34 = arith.constant 0 : index
      %43 = vector.load %arg3[%c0_32, %c0_33, %c0_34] : memref<1x8x128xf32, #tpu.memory_space<vmem>>, vector<1x8x128xf32>
      %44 = vector.shape_cast %43 : vector<1x8x128xf32> to vector<8x128xf32>
      %45 = arith.truncf %44 : vector<8x128xf32> to vector<8x128xbf16>
      %46 = vector.shape_cast %45 : vector<8x128xbf16> to vector<1x8x128xbf16>
      %47 = vector.broadcast %46 : vector<1x8x128xbf16> to vector<4x8x128xbf16>
      %c0_35 = arith.constant 0 : index
      %c0_36 = arith.constant 0 : index
      %c0_37 = arith.constant 0 : index
      %48 = vector.load %arg4[%c0_35, %c0_36, %c0_37] : memref<1x8x128xf32, #tpu.memory_space<vmem>>, vector<1x8x128xf32>
      %49 = vector.shape_cast %48 : vector<1x8x128xf32> to vector<8x128xf32>
      %50 = arith.truncf %49 : vector<8x128xf32> to vector<8x128xbf16>
      %51 = vector.shape_cast %50 : vector<8x128xbf16> to vector<1x8x128xbf16>
      %52 = vector.broadcast %51 : vector<1x8x128xbf16> to vector<4x8x128xbf16>
      %c1 = arith.constant 1 : index
      %c0_38 = arith.constant 0 : index
      %c0_39 = arith.constant 0 : index
      %c0_40 = arith.constant 0 : index
      %53 = vector.load %arg5[%c1, %c0_38, %c0_39, %c0_40] : memref<3x4x128x32xbf16, #tpu.memory_space<vmem>>, vector<1x4x128x32xbf16>
      %54 = vector.shape_cast %53 : vector<1x4x128x32xbf16> to vector<4x128x32xbf16>
      "tpu.trace_start"() <{level = 10 : i32, message = "hld,hdc->hlc"}> : () -> ()
      %cst_41 = arith.constant dense<0.000000e+00> : vector<4x8x32xf32>
      %55 = tpu.matmul %47, %54, %cst_41 {dimension_numbers = #tpu.dot_dimension_numbers<[2], [1], [1], [2], [0, 0, 0, 1, 1, 2], [0], [0]>} : vector<4x8x128xbf16>, vector<4x128x32xbf16>, vector<4x8x32xf32> -> vector<4x8x32xf32>
      "tpu.trace_stop"() : () -> ()
      %c1_42 = arith.constant 1 : index
      %c0_43 = arith.constant 0 : index
      %c0_44 = arith.constant 0 : index
      %c0_45 = arith.constant 0 : index
      %56 = vector.load %arg6[%c1_42, %c0_43, %c0_44, %c0_45] : memref<3x4x1x32xf32, #tpu.memory_space<vmem>>, vector<1x4x1x32xf32>
      %57 = vector.shape_cast %56 : vector<1x4x1x32xf32> to vector<4x1x32xf32>
      %58 = vector.broadcast %57 : vector<4x1x32xf32> to vector<4x8x32xf32>
      %59 = arith.addf %55, %58 : vector<4x8x32xf32>
      %c2 = arith.constant 2 : index
      %c0_46 = arith.constant 0 : index
      %c0_47 = arith.constant 0 : index
      %c0_48 = arith.constant 0 : index
      %60 = vector.load %arg5[%c2, %c0_46, %c0_47, %c0_48] : memref<3x4x128x32xbf16, #tpu.memory_space<vmem>>, vector<1x4x128x32xbf16>
      %61 = vector.shape_cast %60 : vector<1x4x128x32xbf16> to vector<4x128x32xbf16>
      "tpu.trace_start"() <{level = 10 : i32, message = "hld,hdc->hlc"}> : () -> ()
      %cst_49 = arith.constant dense<0.000000e+00> : vector<4x8x32xf32>
      %62 = tpu.matmul %52, %61, %cst_49 {dimension_numbers = #tpu.dot_dimension_numbers<[2], [1], [1], [2], [0, 0, 0, 1, 1, 2], [0], [0]>} : vector<4x8x128xbf16>, vector<4x128x32xbf16>, vector<4x8x32xf32> -> vector<4x8x32xf32>
      "tpu.trace_stop"() : () -> ()
      %c2_50 = arith.constant 2 : index
      %c0_51 = arith.constant 0 : index
      %c0_52 = arith.constant 0 : index
      %c0_53 = arith.constant 0 : index
      %63 = vector.load %arg6[%c2_50, %c0_51, %c0_52, %c0_53] : memref<3x4x1x32xf32, #tpu.memory_space<vmem>>, vector<1x4x1x32xf32>
      %64 = vector.shape_cast %63 : vector<1x4x1x32xf32> to vector<4x1x32xf32>
      %65 = vector.broadcast %64 : vector<4x1x32xf32> to vector<4x8x32xf32>
      %66 = arith.addf %62, %65 : vector<4x8x32xf32>
      %67 = arith.truncf %59 : vector<4x8x32xf32> to vector<4x8x32xbf16>
      %c0_54 = arith.constant 0 : index
      %c0_55 = arith.constant 0 : index
      %c0_56 = arith.constant 0 : index
      %68 = vector.load %arg10[%c0_54, %c0_55, %c0_56] : memref<4x8x32xbf16, #tpu.memory_space<vmem>>, vector<4x8x32xbf16>
      tpu.vector_store %arg10[%c0_54, %c0_55, %c0_56], %67 {strides = array<i32>} : memref<4x8x32xbf16, #tpu.memory_space<vmem>>, vector<4x8x32xbf16>,
      %69 = arith.truncf %66 : vector<4x8x32xf32> to vector<4x8x32xbf16>
      %c0_57 = arith.constant 0 : index
      %c0_58 = arith.constant 0 : index
      %c0_59 = arith.constant 0 : index
      %70 = vector.load %arg11[%c0_57, %c0_58, %c0_59] : memref<4x8x32xbf16, #tpu.memory_space<vmem>>, vector<4x8x32xbf16>
      tpu.vector_store %arg11[%c0_57, %c0_58, %c0_59], %69 {strides = array<i32>} : memref<4x8x32xbf16, #tpu.memory_space<vmem>>, vector<4x8x32xbf16>,
    } else {
    }
    %c0 = arith.constant 0 : index
    %c0_1 = arith.constant 0 : index
    %c0_2 = arith.constant 0 : index
    %3 = vector.load %arg2[%c0, %c0_1, %c0_2] : memref<1x8x128xf32, #tpu.memory_space<vmem>>, vector<1x8x128xf32>
    %4 = vector.shape_cast %3 : vector<1x8x128xf32> to vector<8x128xf32>
    %5 = arith.truncf %4 : vector<8x128xf32> to vector<8x128xbf16>
    %6 = vector.shape_cast %5 : vector<8x128xbf16> to vector<1x8x128xbf16>
    %7 = vector.broadcast %6 : vector<1x8x128xbf16> to vector<4x8x128xbf16>
    %c0_3 = arith.constant 0 : index
    %c0_4 = arith.constant 0 : index
    %c0_5 = arith.constant 0 : index
    %c0_6 = arith.constant 0 : index
    %8 = vector.load %arg5[%c0_3, %c0_4, %c0_5, %c0_6] : memref<3x4x128x32xbf16, #tpu.memory_space<vmem>>, vector<1x4x128x32xbf16>
    %9 = vector.shape_cast %8 : vector<1x4x128x32xbf16> to vector<4x128x32xbf16>
    "tpu.trace_start"() <{level = 10 : i32, message = "hqd,hdc->hqc"}> : () -> ()
    %cst = arith.constant dense<0.000000e+00> : vector<4x8x32xf32>
    %10 = tpu.matmul %7, %9, %cst {dimension_numbers = #tpu.dot_dimension_numbers<[2], [1], [1], [2], [0, 0, 0, 1, 1, 2], [0], [0]>} : vector<4x8x128xbf16>, vector<4x128x32xbf16>, vector<4x8x32xf32> -> vector<4x8x32xf32>
    "tpu.trace_stop"() : () -> ()
    %c0_7 = arith.constant 0 : index
    %c0_8 = arith.constant 0 : index
    %c0_9 = arith.constant 0 : index
    %c0_10 = arith.constant 0 : index
    %11 = vector.load %arg6[%c0_7, %c0_8, %c0_9, %c0_10] : memref<3x4x1x32xf32, #tpu.memory_space<vmem>>, vector<1x4x1x32xf32>
    %12 = vector.shape_cast %11 : vector<1x4x1x32xf32> to vector<4x1x32xf32>
    %13 = vector.broadcast %12 : vector<4x1x32xf32> to vector<4x8x32xf32>
    %14 = arith.addf %10, %13 : vector<4x8x32xf32>
    %cst_11 = arith.constant 0.176776692 : f32
    %15 = vector.broadcast %cst_11 : f32 to vector<4x8x32xf32>
    %16 = arith.mulf %14, %15 : vector<4x8x32xf32>
    %17 = arith.truncf %16 : vector<4x8x32xf32> to vector<4x8x32xbf16>
    %c0_12 = arith.constant 0 : index
    %c0_13 = arith.constant 0 : index
    %c0_14 = arith.constant 0 : index
    %18 = vector.load %arg10[%c0_12, %c0_13, %c0_14] : memref<4x8x32xbf16, #tpu.memory_space<vmem>>, vector<4x8x32xbf16>
    %c0_15 = arith.constant 0 : index
    %c0_16 = arith.constant 0 : index
    %c0_17 = arith.constant 0 : index
    %19 = vector.load %arg11[%c0_15, %c0_16, %c0_17] : memref<4x8x32xbf16, #tpu.memory_space<vmem>>, vector<4x8x32xbf16>
    "tpu.trace_start"() <{level = 10 : i32, message = "hqc,hlc->hql"}> : () -> ()
    %cst_18 = arith.constant dense<0.000000e+00> : vector<4x8x8xf32>
    %20 = tpu.matmul %17, %18, %cst_18 {dimension_numbers = #tpu.dot_dimension_numbers<[2], [2], [1], [1], [0, 0, 0, 1, 1, 1], [0], [0]>} : vector<4x8x32xbf16>, vector<4x8x32xbf16>, vector<4x8x8xf32> -> vector<4x8x8xf32>
    "tpu.trace_stop"() : () -> ()
    %cst_19 = arith.constant dense<0xFF800000> : vector<4x8xf32>
    %21 = vector.multi_reduction <maximumf>, %20, %cst_19 [2] : vector<4x8x8xf32> to vector<4x8xf32>
    %22 = vector.shape_cast %21 : vector<4x8xf32> to vector<4x8x1xf32>
    %23 = vector.broadcast %22 : vector<4x8x1xf32> to vector<4x8x8xf32>
    %24 = arith.subf %20, %23 : vector<4x8x8xf32>
    %25 = math.exp %24 : vector<4x8x8xf32>
    %cst_20 = arith.constant dense<0.000000e+00> : vector<4x8xf32>
    %26 = vector.multi_reduction <add>, %25, %cst_20 [2] : vector<4x8x8xf32> to vector<4x8xf32>
    %27 = vector.shape_cast %26 : vector<4x8xf32> to vector<4x8x1xf32>
    %28 = tpu.reciprocal %27 {approx = true} : vector<4x8x1xf32> -> vector<4x8x1xf32>
    %29 = vector.broadcast %28 : vector<4x8x1xf32> to vector<4x8x8xf32>
    %30 = arith.mulf %25, %29 : vector<4x8x8xf32>
    %31 = arith.truncf %30 : vector<4x8x8xf32> to vector<4x8x8xbf16>
    "tpu.trace_start"() <{level = 10 : i32, message = "hql,hlc->hqc"}> : () -> ()
    %cst_21 = arith.constant dense<0.000000e+00> : vector<4x8x32xf32>
    %32 = tpu.matmul %31, %19, %cst_21 {dimension_numbers = #tpu.dot_dimension_numbers<[2], [1], [1], [2], [0, 0, 0, 1, 1, 2], [0], [0]>} : vector<4x8x8xbf16>, vector<4x8x32xbf16>, vector<4x8x32xf32> -> vector<4x8x32xf32>
    "tpu.trace_stop"() : () -> ()
    %33 = arith.truncf %32 : vector<4x8x32xf32> to vector<4x8x32xbf16>
    %c0_22 = arith.constant 0 : index
    %c0_23 = arith.constant 0 : index
    %c0_24 = arith.constant 0 : index
    %34 = vector.load %arg7[%c0_22, %c0_23, %c0_24] : memref<4x32x128xbf16, #tpu.memory_space<vmem>>, vector<4x32x128xbf16>
    "tpu.trace_start"() <{level = 10 : i32, message = "hqc,hcd->hqd"}> : () -> ()
    %cst_25 = arith.constant dense<0.000000e+00> : vector<4x8x128xf32>
    %35 = tpu.matmul %33, %34, %cst_25 {dimension_numbers = #tpu.dot_dimension_numbers<[2], [1], [1], [2], [0, 0, 0, 1, 1, 2], [0], [0]>} : vector<4x8x32xbf16>, vector<4x32x128xbf16>, vector<4x8x128xf32> -> vector<4x8x128xf32>
    "tpu.trace_stop"() : () -> ()
    %cst_26 = arith.constant dense<0.000000e+00> : vector<8x128xf32>
    %36 = vector.multi_reduction <add>, %35, %cst_26 [0] : vector<4x8x128xf32> to vector<8x128xf32>
    %c0_27 = arith.constant 0 : index
    %c0_28 = arith.constant 0 : index
    %37 = vector.load %arg8[%c0_27, %c0_28] : memref<1x128xf32, #tpu.memory_space<vmem>>, vector<1x128xf32>
    %38 = vector.broadcast %37 : vector<1x128xf32> to vector<8x128xf32>
    %39 = arith.addf %36, %38 : vector<8x128xf32>
    %c0_29 = arith.constant 0 : index
    %c0_30 = arith.constant 0 : index
    %c0_31 = arith.constant 0 : index
    %40 = vector.load %arg9[%c0_29, %c0_30, %c0_31] : memref<1x8x128xf32, #tpu.memory_space<vmem>>, vector<1x8x128xf32>
    %41 = vector.shape_cast %40 : vector<1x8x128xf32> to vector<8x128xf32>
    %42 = vector.shape_cast %39 : vector<8x128xf32> to vector<1x8x128xf32>
    tpu.vector_store %arg9[%c0_29, %c0_30, %c0_31], %42 {strides = array<i32>} : memref<1x8x128xf32, #tpu.memory_space<vmem>>, vector<1x8x128xf32>,
    return
  }
  func.func @transform_0(%arg0: i32, %arg1: i32) -> (i32, i32, i32) {
    %c0_i32 = arith.constant 0 : i32
    %c0_i32_0 = arith.constant 0 : i32
    return %arg0, %arg1, %c0_i32 : i32, i32, i32
  }
  func.func @transform_1(%arg0: i32, %arg1: i32) -> (i32, i32, i32) {
    %c0_i32 = arith.constant 0 : i32
    %c0_i32_0 = arith.constant 0 : i32
    %c0_i32_1 = arith.constant 0 : i32
    return %arg0, %c0_i32, %c0_i32_0 : i32, i32, i32
  }
  func.func @transform_2(%arg0: i32, %arg1: i32) -> (i32, i32, i32) {
    %c0_i32 = arith.constant 0 : i32
    %c0_i32_0 = arith.constant 0 : i32
    %c0_i32_1 = arith.constant 0 : i32
    return %arg0, %c0_i32, %c0_i32_0 : i32, i32, i32
  }
  func.func @transform_3(%arg0: i32, %arg1: i32) -> (i32, i32, i32, i32) {
    %c0_i32 = arith.constant 0 : i32
    %c0_i32_0 = arith.constant 0 : i32
    %c0_i32_1 = arith.constant 0 : i32
    %c0_i32_2 = arith.constant 0 : i32
    %c0_i32_3 = arith.constant 0 : i32
    return %c0_i32, %c0_i32_0, %c0_i32_1, %c0_i32_2 : i32, i32, i32, i32
  }
  func.func @transform_4(%arg0: i32, %arg1: i32) -> (i32, i32, i32, i32) {
    %c0_i32 = arith.constant 0 : i32
    %c0_i32_0 = arith.constant 0 : i32
    %c0_i32_1 = arith.constant 0 : i32
    %c0_i32_2 = arith.constant 0 : i32
    %c0_i32_3 = arith.constant 0 : i32
    return %c0_i32, %c0_i32_0, %c0_i32_1, %c0_i32_2 : i32, i32, i32, i32
  }
  func.func @transform_5(%arg0: i32, %arg1: i32) -> (i32, i32, i32) {
    %c0_i32 = arith.constant 0 : i32
    %c0_i32_0 = arith.constant 0 : i32
    %c0_i32_1 = arith.constant 0 : i32
    %c0_i32_2 = arith.constant 0 : i32
    return %c0_i32, %c0_i32_0, %c0_i32_1 : i32, i32, i32
  }
  func.func @transform_6(%arg0: i32, %arg1: i32) -> (i32, i32) {
    %c0_i32 = arith.constant 0 : i32
    %c0_i32_0 = arith.constant 0 : i32
    %c0_i32_1 = arith.constant 0 : i32
    return %c0_i32, %c0_i32_0 : i32, i32
  }
  func.func @transform_7(%arg0: i32, %arg1: i32) -> (i32, i32, i32) {
    %c0_i32 = arith.constant 0 : i32
    %c0_i32_0 = arith.constant 0 : i32
    return %arg0, %arg1, %c0_i32 : i32, i32, i32
  }
}

</mosaic_0001>

<llo_original>
// kernel: tpu_custom_call.1
$region0: #{tpu_custom_call.1}
  #allocation0 [shape = 'u32[]', space=smem, size = 0x4, offset = 0x4, fixed_abs, tag = 'smem constant byte address 0x4 - core index']
  #allocation1 [shape = 'u32[144,128]{1,0:T(1,128)}', space=vmem, size = 0x12000, scoped, tag = 'internal scratch']
  #allocation2 [shape = 'bf16[4,8,32]{2,1,0:T(8,128)(2,1)}', space=vmem, size = 0x2000, scoped, tag = 'scratch operand']
  #allocation3 [shape = 'bf16[4,8,32]{2,1,0:T(8,128)(2,1)}', space=vmem, size = 0x2000, scoped, tag = 'scratch operand']
  %s0 = inlined_call_operand.vmem [shape: f32[2,8,128], index: 0, kind: input, shape index: {}]
  %s1 = inlined_call_operand.vmem [shape: f32[2,8,128], index: 1, kind: input, shape index: {}]
  %s2 = inlined_call_operand.vmem [shape: f32[2,8,128], index: 2, kind: input, shape index: {}]
  %s3 = inlined_call_operand.vmem [shape: bf16[3,4,128,32], index: 3, kind: input, shape index: {}]
  %s4 = inlined_call_operand.vmem [shape: f32[3,4,1,32], index: 4, kind: input, shape index: {}]
  %s5 = inlined_call_operand.vmem [shape: bf16[4,32,128], index: 5, kind: input, shape index: {}]
  %s6 = inlined_call_operand.vmem [shape: f32[1,128], index: 6, kind: input, shape index: {}]
  %s7 = inlined_call_operand.hbm [shape: f32[2,8,128], index: 7, kind: output, shape index: {}]
  %s8 = sld [smem:[#allocation0]]
  $region65: #{tpu_custom_call.1} parent=0
    _
  %s10 = ssub.s32 1, %s8
  %s11 = scalar_select 0, %s10, %s8
  $region1: #{tpu_custom_call.1} parent=0
    #allocation4 [shape = 'u8[8192]{0}', space=vmem, size = 0x2000, scoped, tag = 'output window, operand 0']
    #allocation5 [shape = 's32[2]{0}', space=sflag, size = 0x8, scoped, tag = 'scoped memory for tpu_custom_call.1']
    %12 = vsyncpa [#allocation5], 0
    %s13 = scalar_lea.sflag [#allocation5], 1
    %14 = vsyncpa %s13, 0
    loop: start=0, step=1, limit=4
    $region2: #{tpu_custom_call.1} parent=1 // loop_pre_header
      _
    $region3: #{tpu_custom_call.1} parent=1 // loop_header
      %s16 = sphi 0, %s20
      %p17 = scmp.ge.s32.totalorder %s16, 4
      %s23 = sphi 0, %s35
      %s24 = sphi 0, %s31
      %s25 = sphi 0, %s23
      %s26 = sphi 0, %s24
      %s27 = sphi 0, %s25
      %s28 = sphi 0, %s26
      %s40 = sphi 0, %s42
      %s43 = sphi 0, %s40
      %s44 = sphi 0, %s43
      %s60 = sphi 0, %s44
      %s66 = sphi 0, %s68
      %s69 = sphi 0, %s66
      %s70 = sphi 0, %s69
      %s86 = sphi 0, %s70
      %s92 = sphi 0, %s94
      %s95 = sphi 0, %s92
      %s96 = sphi 0, %s95
      %s112 = sphi 0, %s96
      %s116 = sphi 0, %s116
      %s118 = sphi 0, %s116
      %s119 = sphi 0, %s118
      %s133 = sphi 0, %s119
      %s137 = sphi 0, %s137
      %s139 = sphi 0, %s137
      %s140 = sphi 0, %s139
      %s154 = sphi 0, %s140
      %s158 = sphi 0, %s158
      %s160 = sphi 0, %s158
      %s161 = sphi 0, %s160
      %s175 = sphi 0, %s161
      %s179 = sphi 0, %s179
      %s181 = sphi 0, %s179
      %s182 = sphi 0, %s181
      %s196 = sphi 0, %s182
      %s204 = sphi 0, %s206
      %s207 = sphi 0, %s204
      %s208 = sphi 0, %s207
      %s224 = sphi 0, %s208
    $region4: #{tpu_custom_call.1} parent=1 // loop_header_branch
      %19 = sbr.rel (%p17) target = $region8
    $region5: #{tpu_custom_call.1} parent=1 // loop_body
      %s21 = ssub.s32 %s16, 1
      %s22 = ssub.s32 %s16, 2
      %s29 = sadd.s32 1, %s24
      %p30 = scmp.ge.s32.totalorder %s29, 1
      %s31 = scalar_select %p30, 0, %s29
      %s32 = sadd.s32 1, %s23
      %s33 = scalar_select %p30, %s32, %s23
      %p34 = scmp.ge.s32.totalorder %s33, 2
      %s35 = scalar_select %p34, 0, %s33
      %s36 = ssub.s32 %s23, %s35
      %s37 = ssub.s32 %s24, %s31
      %s38 = sor.u32 %s36, %s37
      %p39 = scmp.eq.s32.totalorder %s38, 0
      %s41 = sadd.s32 %s40, 1
      %s42 = scalar_select %p39, %s40, %s41
      %p45 = pneg %p39
      %p46 = scmp.eq.s32.totalorder %s16, 1
      %p47 = por %p45, %p46
      %p48 = scmp.ne.s32.totalorder %s40, %s43
      %p49 = scmp.eq.s32.totalorder %s16, 0
      %p50 = por %p48, %p49
      %p51 = scmp.ne.s32.totalorder %s40, %s43
      %p52 = scmp.eq.s32.totalorder %s21, 1
      %p53 = por %p51, %p52
      %p54 = scmp.ne.s32.totalorder %s43, %s44
      %p55 = scmp.eq.s32.totalorder %s21, 0
      %p56 = por %p54, %p55
      %p57 = scmp.ne.s32.totalorder %s43, %s44
      %p58 = scmp.eq.s32.totalorder %s22, 1
      %p59 = por %p57, %p58
      %p61 = scmp.ne.s32.totalorder %s44, %s60
      %p62 = scmp.eq.s32.totalorder %s22, 0
      %p63 = por %p61, %p62
      %s64 = ssub.s32 %s23, %s35
      %p65 = scmp.eq.s32.totalorder %s64, 0
      %s67 = sadd.s32 %s66, 1
      %s68 = scalar_select %p65, %s66, %s67
      %p71 = pneg %p65
      %p72 = scmp.eq.s32.totalorder %s16, 1
      %p73 = por %p71, %p72
      %p74 = scmp.ne.s32.totalorder %s66, %s69
      %p75 = scmp.eq.s32.totalorder %s16, 0
      %p76 = por %p74, %p75
      %p77 = scmp.ne.s32.totalorder %s66, %s69
      %p78 = scmp.eq.s32.totalorder %s21, 1
      %p79 = por %p77, %p78
      %p80 = scmp.ne.s32.totalorder %s69, %s70
      %p81 = scmp.eq.s32.totalorder %s21, 0
      %p82 = por %p80, %p81
      %p83 = scmp.ne.s32.totalorder %s69, %s70
      %p84 = scmp.eq.s32.totalorder %s22, 1
      %p85 = por %p83, %p84
      %p87 = scmp.ne.s32.totalorder %s70, %s86
      %p88 = scmp.eq.s32.totalorder %s22, 0
      %p89 = por %p87, %p88
      %s90 = ssub.s32 %s23, %s35
      %p91 = scmp.eq.s32.totalorder %s90, 0
      %s93 = sadd.s32 %s92, 1
      %s94 = scalar_select %p91, %s92, %s93
      %p97 = pneg %p91
      %p98 = scmp.eq.s32.totalorder %s16, 1
      %p99 = por %p97, %p98
      %p100 = scmp.ne.s32.totalorder %s92, %s95
      %p101 = scmp.eq.s32.totalorder %s16, 0
      %p102 = por %p100, %p101
      %p103 = scmp.ne.s32.totalorder %s92, %s95
      %p104 = scmp.eq.s32.totalorder %s21, 1
      %p105 = por %p103, %p104
      %p106 = scmp.ne.s32.totalorder %s95, %s96
      %p107 = scmp.eq.s32.totalorder %s21, 0
      %p108 = por %p106, %p107
      %p109 = scmp.ne.s32.totalorder %s95, %s96
      %p110 = scmp.eq.s32.totalorder %s22, 1
      %p111 = por %p109, %p110
      %p113 = scmp.ne.s32.totalorder %s96, %s112
      %p114 = scmp.eq.s32.totalorder %s22, 0
      %p115 = por %p113, %p114
      %s117 = sadd.s32 %s116, 1
      %p120 = scmp.eq.s32.totalorder %s16, 1
      %p121 = scmp.ne.s32.totalorder %s116, %s118
      %p122 = scmp.eq.s32.totalorder %s16, 0
      %p123 = por %p121, %p122
      %p124 = scmp.ne.s32.totalorder %s116, %s118
      %p125 = scmp.eq.s32.totalorder %s21, 1
      %p126 = por %p124, %p125
      %p127 = scmp.ne.s32.totalorder %s118, %s119
      %p128 = scmp.eq.s32.totalorder %s21, 0
      %p129 = por %p127, %p128
      %p130 = scmp.ne.s32.totalorder %s118, %s119
      %p131 = scmp.eq.s32.totalorder %s22, 1
      %p132 = por %p130, %p131
      %p134 = scmp.ne.s32.totalorder %s119, %s133
      %p135 = scmp.eq.s32.totalorder %s22, 0
      %p136 = por %p134, %p135
      %s138 = sadd.s32 %s137, 1
      %p141 = scmp.eq.s32.totalorder %s16, 1
      %p142 = scmp.ne.s32.totalorder %s137, %s139
      %p143 = scmp.eq.s32.totalorder %s16, 0
      %p144 = por %p142, %p143
      %p145 = scmp.ne.s32.totalorder %s137, %s139
      %p146 = scmp.eq.s32.totalorder %s21, 1
      %p147 = por %p145, %p146
      %p148 = scmp.ne.s32.totalorder %s139, %s140
      %p149 = scmp.eq.s32.totalorder %s21, 0
      %p150 = por %p148, %p149
      %p151 = scmp.ne.s32.totalorder %s139, %s140
      %p152 = scmp.eq.s32.totalorder %s22, 1
      %p153 = por %p151, %p152
      %p155 = scmp.ne.s32.totalorder %s140, %s154
      %p156 = scmp.eq.s32.totalorder %s22, 0
      %p157 = por %p155, %p156
      %s159 = sadd.s32 %s158, 1
      %p162 = scmp.eq.s32.totalorder %s16, 1
      %p163 = scmp.ne.s32.totalorder %s158, %s160
      %p164 = scmp.eq.s32.totalorder %s16, 0
      %p165 = por %p163, %p164
      %p166 = scmp.ne.s32.totalorder %s158, %s160
      %p167 = scmp.eq.s32.totalorder %s21, 1
      %p168 = por %p166, %p167
      %p169 = scmp.ne.s32.totalorder %s160, %s161
      %p170 = scmp.eq.s32.totalorder %s21, 0
      %p171 = por %p169, %p170
      %p172 = scmp.ne.s32.totalorder %s160, %s161
      %p173 = scmp.eq.s32.totalorder %s22, 1
      %p174 = por %p172, %p173
      %p176 = scmp.ne.s32.totalorder %s161, %s175
      %p177 = scmp.eq.s32.totalorder %s22, 0
      %p178 = por %p176, %p177
      %s180 = sadd.s32 %s179, 1
      %p183 = scmp.eq.s32.totalorder %s16, 1
      %p184 = scmp.ne.s32.totalorder %s179, %s181
      %p185 = scmp.eq.s32.totalorder %s16, 0
      %p186 = por %p184, %p185
      %p187 = scmp.ne.s32.totalorder %s179, %s181
      %p188 = scmp.eq.s32.totalorder %s21, 1
      %p189 = por %p187, %p188
      %p190 = scmp.ne.s32.totalorder %s181, %s182
      %p191 = scmp.eq.s32.totalorder %s21, 0
      %p192 = por %p190, %p191
      %p193 = scmp.ne.s32.totalorder %s181, %s182
      %p194 = scmp.eq.s32.totalorder %s22, 1
      %p195 = por %p193, %p194
      %p197 = scmp.ne.s32.totalorder %s182, %s196
      %p198 = scmp.eq.s32.totalorder %s22, 0
      %p199 = por %p197, %p198
      %s200 = ssub.s32 %s23, %s35
      %s201 = ssub.s32 %s24, %s31
      %s202 = sor.u32 %s200, %s201
      %p203 = scmp.eq.s32.totalorder %s202, 0
      %s205 = sadd.s32 %s204, 1
      %s206 = scalar_select %p203, %s204, %s205
      %p209 = pneg %p203
      %p210 = scmp.eq.s32.totalorder %s16, 1
      %p211 = por %p209, %p210
      %p212 = scmp.ne.s32.totalorder %s204, %s207
      %p213 = scmp.eq.s32.totalorder %s16, 0
      %p214 = por %p212, %p213
      %p215 = scmp.ne.s32.totalorder %s204, %s207
      %p216 = scmp.eq.s32.totalorder %s21, 1
      %p217 = por %p215, %p216
      %p218 = scmp.ne.s32.totalorder %s207, %s208
      %p219 = scmp.eq.s32.totalorder %s21, 0
      %p220 = por %p218, %p219
      %p221 = scmp.ne.s32.totalorder %s207, %s208
      %p222 = scmp.eq.s32.totalorder %s22, 1
      %p223 = por %p221, %p222
      %p225 = scmp.ne.s32.totalorder %s208, %s224
      %p226 = scmp.eq.s32.totalorder %s22, 0
      %p227 = por %p225, %p226
      %p228 = scmp.le.s32.totalorder 1, %s16
      %p229 = scmp.lt.s32.totalorder %s16, 3
      %p230 = pnand %p228, %p229
      %p231 = pneg %p230
      // Predicated region
      $region9: #{tpu_custom_call.1} parent=5 // pred_check
        _
      $region10: #{tpu_custom_call.1} parent=5 // pred_check_branch
        %233 = sbr.rel (%p230) target = $region12
      $region11: #{tpu_custom_call.1} parent=5 // pred_region
        %s234 = ssub.s32 %s16, 1
        // Predicated region
        $region13: #{tpu_custom_call.1} parent=11 // pred_check
          %p235 = pneg %p129
        $region14: #{tpu_custom_call.1} parent=11 // pred_check_branch
          %237 = sbr.rel (%p235) target = $region16
        $region15: #{tpu_custom_call.1} parent=11 // pred_region
          _
        $region16: #{tpu_custom_call.1} parent=11 // pred_fallthru
          _
        // Predicated region
        $region17: #{tpu_custom_call.1} parent=11 // pred_check
          %p238 = pneg %p150
        $region18: #{tpu_custom_call.1} parent=11 // pred_check_branch
          %240 = sbr.rel (%p238) target = $region20
        $region19: #{tpu_custom_call.1} parent=11 // pred_region
          _
        $region20: #{tpu_custom_call.1} parent=11 // pred_fallthru
          _
        // Predicated region
        $region21: #{tpu_custom_call.1} parent=11 // pred_check
          %p241 = pneg %p171
        $region22: #{tpu_custom_call.1} parent=11 // pred_check_branch
          %243 = sbr.rel (%p241) target = $region24
        $region23: #{tpu_custom_call.1} parent=11 // pred_region
          _
        $region24: #{tpu_custom_call.1} parent=11 // pred_fallthru
          _
        // Predicated region
        $region25: #{tpu_custom_call.1} parent=11 // pred_check
          %p244 = pneg %p192
        $region26: #{tpu_custom_call.1} parent=11 // pred_check_branch
          %246 = sbr.rel (%p244) target = $region28
        $region27: #{tpu_custom_call.1} parent=11 // pred_region
          _
        $region28: #{tpu_custom_call.1} parent=11 // pred_fallthru
          _
      $region12: #{tpu_custom_call.1} parent=5 // pred_fallthru
        _
      %p247 = scmp.lt.s32.totalorder %s16, 2
      // Predicated region
      $region29: #{tpu_custom_call.1} parent=5 // pred_check
        %p248 = pneg %p247
      $region30: #{tpu_custom_call.1} parent=5 // pred_check_branch
        %250 = sbr.rel (%p248) target = $region32
      $region31: #{tpu_custom_call.1} parent=5 // pred_region
        // Predicated region
        $region33: #{tpu_custom_call.1} parent=31 // pred_check
          %p251 = pneg %p50
        $region34: #{tpu_custom_call.1} parent=31 // pred_check_branch
          %253 = sbr.rel (%p251) target = $region36
        $region35: #{tpu_custom_call.1} parent=31 // pred_region
          %p254 = scmp.lt.s32.totalorder %s23, 1
          %s255 = scalar_select %p254, %s23, 1
          %p256 = scmp.lt.s32.totalorder %s24, 0
          %s257 = scalar_select %p256, %s24, 0
          %s258 = sadd.s32 %s257, %s255
          %s259 = smul.addr %s258, 8
          %s260 = scalar_lea.vmem %s0, %s259
        $region36: #{tpu_custom_call.1} parent=31 // pred_fallthru
          _
        // Predicated region
        $region37: #{tpu_custom_call.1} parent=31 // pred_check
          %p261 = pneg %p76
        $region38: #{tpu_custom_call.1} parent=31 // pred_check_branch
          %263 = sbr.rel (%p261) target = $region40
        $region39: #{tpu_custom_call.1} parent=31 // pred_region
          %p264 = scmp.lt.s32.totalorder %s23, 1
          %s265 = scalar_select %p264, %s23, 1
          %s266 = smul.addr %s265, 8
          %s267 = scalar_lea.vmem %s1, %s266
        $region40: #{tpu_custom_call.1} parent=31 // pred_fallthru
          _
        // Predicated region
        $region41: #{tpu_custom_call.1} parent=31 // pred_check
          %p268 = pneg %p102
        $region42: #{tpu_custom_call.1} parent=31 // pred_check_branch
          %270 = sbr.rel (%p268) target = $region44
        $region43: #{tpu_custom_call.1} parent=31 // pred_region
          %p271 = scmp.lt.s32.totalorder %s23, 1
          %s272 = scalar_select %p271, %s23, 1
          %s273 = smul.addr %s272, 8
          %s274 = scalar_lea.vmem %s2, %s273
        $region44: #{tpu_custom_call.1} parent=31 // pred_fallthru
          _
      $region32: #{tpu_custom_call.1} parent=5 // pred_fallthru
        _
      %p275 = scmp.le.s32.totalorder 1, %s16
      %p276 = scmp.lt.s32.totalorder %s16, 3
      %p277 = pnand %p275, %p276
      %p278 = pneg %p277
      // Predicated region
      $region45: #{tpu_custom_call.1} parent=5 // pred_check
        _
      $region46: #{tpu_custom_call.1} parent=5 // pred_check_branch
        %280 = sbr.rel (%p277) target = $region48
      $region47: #{tpu_custom_call.1} parent=5 // pred_region
        %s281 = ssub.s32 %s16, 1
        %p282 = scmp.lt.s32.totalorder %s25, 1
        %s283 = scalar_select %p282, %s25, 1
        %p284 = scmp.lt.s32.totalorder %s26, 0
        %s285 = scalar_select %p284, %s26, 0
        %s286 = sadd.s32 %s285, %s283
        %s287 = smul.addr %s286, 8
        %s288 = scalar_lea.vmem %s0, %s287
        %p289 = pneg %p56
        %p290 = pneg %p53
        %p291 = scmp.lt.s32.totalorder %s25, 1
        %s292 = scalar_select %p291, %s25, 1
        %s293 = smul.addr %s292, 8
        %s294 = scalar_lea.vmem %s1, %s293
        %p295 = pneg %p82
        %p296 = pneg %p79
        %p297 = scmp.lt.s32.totalorder %s25, 1
        %s298 = scalar_select %p297, %s25, 1
        %s299 = smul.addr %s298, 8
        %s300 = scalar_lea.vmem %s2, %s299
        %p301 = pneg %p108
        %p302 = pneg %p105
        %p303 = pneg %p129
        %p304 = pneg %p126
        %p305 = pneg %p150
        %p306 = pneg %p147
        %p307 = pneg %p171
        %p308 = pneg %p168
        %p309 = pneg %p192
        %p310 = pneg %p189
        %p311 = pneg %p220
        %p312 = pneg %p217
        %s313 = sand.u32 %s207, 1
        %s314 = scalar_lea.sflag [#allocation5], %s313
        %s315 = sand.u32 %s207, 1
        %s316 = smul.addr %s315, 8
        %s317 = scalar_lea.vmem [#allocation4], %s316
        %p318 = scmp.lt.s32.totalorder %s25, 1
        %s319 = scalar_select %p318, %s25, 1
        %p320 = scmp.lt.s32.totalorder %s26, 0
        %s321 = scalar_select %p320, %s26, 0
        %s322 = sadd.s32 %s321, %s319
        %s323 = smul.addr %s322, 8
        %s324 = scalar_lea.vmem %s0, %s323
        %p325 = scmp.lt.s32.totalorder %s25, 1
        %s326 = scalar_select %p325, %s25, 1
        %s327 = smul.addr %s326, 8
        %s328 = scalar_lea.vmem %s1, %s327
        %p329 = scmp.lt.s32.totalorder %s25, 1
        %s330 = scalar_select %p329, %s25, 1
        %s331 = smul.addr %s330, 8
        %s332 = scalar_lea.vmem %s2, %s331
        %p334 = scmp.eq.s32.totalorder %s26, 0
        // Predicated region
        $region49: #{tpu_custom_call.1} parent=47 // pred_check
          %p335 = pneg %p334
        $region50: #{tpu_custom_call.1} parent=47 // pred_check_branch
          %337 = sbr.rel (%p335) target = $region52
        $region51: #{tpu_custom_call.1} parent=47 // pred_region
          %v338 = vld [vmem:[%s328] sm:$0xff]
          %v339 = vpack.c.bf16 %v338, %v338
          %v340 = vld [vmem:[%s332] sm:$0xff]
          %v341 = vpack.c.bf16 %v340, %v340
          %s342 = scalar_lea.vmem %s3, 256
          %v343 = vld [vmem:[%s342] sm:$0xf]
          %v344 = vld [vmem:[%s342 + $0x4] sm:$0xf]
          %v345 = vld [vmem:[%s342 + $0x8] sm:$0xf]
          %v346 = vld [vmem:[%s342 + $0xc] sm:$0xf]
          %v347 = vld [vmem:[%s342 + $0x10] sm:$0xf]
          %v348 = vld [vmem:[%s342 + $0x14] sm:$0xf]
          %v349 = vld [vmem:[%s342 + $0x18] sm:$0xf]
          %v350 = vld [vmem:[%s342 + $0x1c] sm:$0xf]
          %v351 = vld [vmem:[%s342 + $0x20] sm:$0xf]
          %v352 = vld [vmem:[%s342 + $0x24] sm:$0xf]
          %v353 = vld [vmem:[%s342 + $0x28] sm:$0xf]
          %v354 = vld [vmem:[%s342 + $0x2c] sm:$0xf]
          %v355 = vld [vmem:[%s342 + $0x30] sm:$0xf]
          %v356 = vld [vmem:[%s342 + $0x34] sm:$0xf]
          %v357 = vld [vmem:[%s342 + $0x38] sm:$0xf]
          %v358 = vld [vmem:[%s342 + $0x3c] sm:$0xf]
          %v359 = vld [vmem:[%s342 + $0x40] sm:$0xf]
          %v360 = vld [vmem:[%s342 + $0x44] sm:$0xf]
          %v361 = vld [vmem:[%s342 + $0x48] sm:$0xf]
          %v362 = vld [vmem:[%s342 + $0x4c] sm:$0xf]
          %v363 = vld [vmem:[%s342 + $0x50] sm:$0xf]
          %v364 = vld [vmem:[%s342 + $0x54] sm:$0xf]
          %v365 = vld [vmem:[%s342 + $0x58] sm:$0xf]
          %v366 = vld [vmem:[%s342 + $0x5c] sm:$0xf]
          %v367 = vld [vmem:[%s342 + $0x60] sm:$0xf]
          %v368 = vld [vmem:[%s342 + $0x64] sm:$0xf]
          %v369 = vld [vmem:[%s342 + $0x68] sm:$0xf]
          %v370 = vld [vmem:[%s342 + $0x6c] sm:$0xf]
          %v371 = vld [vmem:[%s342 + $0x70] sm:$0xf]
          %v372 = vld [vmem:[%s342 + $0x74] sm:$0xf]
          %v373 = vld [vmem:[%s342 + $0x78] sm:$0xf]
          %v374 = vld [vmem:[%s342 + $0x7c] sm:$0xf]
          %v375 = vld [vmem:[%s342 + $0x80] sm:$0xf]
          %v376 = vld [vmem:[%s342 + $0x84] sm:$0xf]
          %v377 = vld [vmem:[%s342 + $0x88] sm:$0xf]
          %v378 = vld [vmem:[%s342 + $0x8c] sm:$0xf]
          %v379 = vld [vmem:[%s342 + $0x90] sm:$0xf]
          %v380 = vld [vmem:[%s342 + $0x94] sm:$0xf]
          %v381 = vld [vmem:[%s342 + $0x98] sm:$0xf]
          %v382 = vld [vmem:[%s342 + $0x9c] sm:$0xf]
          %v383 = vld [vmem:[%s342 + $0xa0] sm:$0xf]
          %v384 = vld [vmem:[%s342 + $0xa4] sm:$0xf]
          %v385 = vld [vmem:[%s342 + $0xa8] sm:$0xf]
          %v386 = vld [vmem:[%s342 + $0xac] sm:$0xf]
          %v387 = vld [vmem:[%s342 + $0xb0] sm:$0xf]
          %v388 = vld [vmem:[%s342 + $0xb4] sm:$0xf]
          %v389 = vld [vmem:[%s342 + $0xb8] sm:$0xf]
          %v390 = vld [vmem:[%s342 + $0xbc] sm:$0xf]
          %v391 = vld [vmem:[%s342 + $0xc0] sm:$0xf]
          %v392 = vld [vmem:[%s342 + $0xc4] sm:$0xf]
          %v393 = vld [vmem:[%s342 + $0xc8] sm:$0xf]
          %v394 = vld [vmem:[%s342 + $0xcc] sm:$0xf]
          %v395 = vld [vmem:[%s342 + $0xd0] sm:$0xf]
          %v396 = vld [vmem:[%s342 + $0xd4] sm:$0xf]
          %v397 = vld [vmem:[%s342 + $0xd8] sm:$0xf]
          %v398 = vld [vmem:[%s342 + $0xdc] sm:$0xf]
          %v399 = vld [vmem:[%s342 + $0xe0] sm:$0xf]
          %v400 = vld [vmem:[%s342 + $0xe4] sm:$0xf]
          %v401 = vld [vmem:[%s342 + $0xe8] sm:$0xf]
          %v402 = vld [vmem:[%s342 + $0xec] sm:$0xf]
          %v403 = vld [vmem:[%s342 + $0xf0] sm:$0xf]
          %v404 = vld [vmem:[%s342 + $0xf4] sm:$0xf]
          %v405 = vld [vmem:[%s342 + $0xf8] sm:$0xf]
          %v406 = vld [vmem:[%s342 + $0xfc] sm:$0xf]
          %s407 = scalar_lea.vmem %s4, 4
          %v408 = vld [vmem:[%s407] sm:$0x1]
          %v409 = vld [vmem:[%s407 + $0x1] sm:$0x1]
          %v410 = vld [vmem:[%s407 + $0x2] sm:$0x1]
          %v411 = vld [vmem:[%s407 + $0x3] sm:$0x1]
          %v416 = vlaneseq
          %v417 = vshrl.u32 %v416, 7
          %v418 = vsub.s32 0, %v417
          %v419 = vrot.slane %v408, %v418
          %v420 = vlaneseq
          %v421 = vshrl.u32 %v420, 7
          %v422 = vsub.s32 0, %v421
          %v423 = vrot.slane %v409, %v422
          %v424 = vlaneseq
          %v425 = vshrl.u32 %v424, 7
          %v426 = vsub.s32 0, %v425
          %v427 = vrot.slane %v410, %v426
          %v428 = vlaneseq
          %v429 = vshrl.u32 %v428, 7
          %v430 = vsub.s32 0, %v429
          %v431 = vrot.slane %v411, %v430
          %v452 = vunpack.c.l.b16 %v343
          %v453 = vunpack.c.l.b16 %v344
          %v454 = vunpack.c.l.b16 %v345
          %v455 = vunpack.c.l.b16 %v346
          %v456 = vunpack.c.l.b16 %v347
          %v457 = vunpack.c.l.b16 %v348
          %v458 = vunpack.c.l.b16 %v349
          %v459 = vunpack.c.l.b16 %v350
          %v460 = vunpack.c.l.b16 %v351
          %v461 = vunpack.c.l.b16 %v352
          %v462 = vunpack.c.l.b16 %v353
          %v463 = vunpack.c.l.b16 %v354
          %v464 = vunpack.c.l.b16 %v355
          %v465 = vunpack.c.l.b16 %v356
          %v466 = vunpack.c.l.b16 %v357
          %v467 = vunpack.c.l.b16 %v358
          %v468 = vpack.c.b16 %v453, %v452
          %v469 = vpack.c.b16 %v455, %v454
          %v470 = vpack.c.b16 %v457, %v456
          %v471 = vpack.c.b16 %v459, %v458
          %v472 = vpack.c.b16 %v461, %v460
          %v473 = vpack.c.b16 %v463, %v462
          %v474 = vpack.c.b16 %v465, %v464
          %v475 = vpack.c.b16 %v467, %v466
          %484 = vmatprep.subr.bf16.mxu0 0
          %485 = vmatpush1.bf16.msra.mxu0 %v468
          %486 = vmatprep.subr.bf16.mxu0 0
          %487 = vmatpush1.bf16.msra.mxu0 %v469
          %488 = vmatprep.subr.bf16.mxu0 0
          %489 = vmatpush1.bf16.msra.mxu0 %v470
          %490 = vmatprep.subr.bf16.mxu0 0
          %491 = vmatpush1.bf16.msra.mxu0 %v471
          %492 = vmatprep.subr.bf16.mxu0 0
          %493 = vmatpush1.bf16.msra.mxu0 %v472
          %494 = vmatprep.subr.bf16.mxu0 0
          %495 = vmatpush1.bf16.msra.mxu0 %v473
          %496 = vmatprep.subr.bf16.mxu0 0
          %497 = vmatpush1.bf16.msra.mxu0 %v474
          %498 = vmatprep.subr.bf16.mxu0 0
          %499 = vmatpush1.bf16.msra.mxu0 %v475
          %500 = vmatprep.subr.bf16.mxu0 0
          %501 = vmatpush1.bf16.msra.mxu0 0
          %502 = vmatprep.subr.bf16.mxu0 0
          %503 = vmatpush1.bf16.msra.mxu0 0
          %504 = vmatprep.subr.bf16.mxu0 0
          %505 = vmatpush1.bf16.msra.mxu0 0
          %506 = vmatprep.subr.bf16.mxu0 0
          %507 = vmatpush1.bf16.msra.mxu0 0
          %508 = vmatprep.subr.bf16.mxu0 0
          %509 = vmatpush1.bf16.msra.mxu0 0
          %510 = vmatprep.subr.bf16.mxu0 0
          %511 = vmatpush1.bf16.msra.mxu0 0
          %512 = vmatprep.subr.bf16.mxu0 0
          %513 = vmatpush1.bf16.msra.mxu0 0
          %514 = vmatprep.subr.bf16.mxu0 0
          %515 = vmatpush1.bf16.msra.mxu0 0
          %516 = vmatprep.mubr.bf16.mxu0 0
          %517 = vmatmul.mubr.bf16.gmra.mrb[0].mxu0 %v339
          %v518 = vpop.f32.mrb[0].mxu0
          %v519 = vadd.f32 %v419, %v518
          %v520 = vpop.f32.mrb[0].mxu0
          %v521 = vpop.f32.mrb[0].mxu0
          %v522 = vpop.f32.mrb[0].mxu0
          %523 = vdwg.mxu0
          %v540 = vunpack.c.l.b16 %v359
          %v541 = vunpack.c.l.b16 %v360
          %v542 = vunpack.c.l.b16 %v361
          %v543 = vunpack.c.l.b16 %v362
          %v544 = vunpack.c.l.b16 %v363
          %v545 = vunpack.c.l.b16 %v364
          %v546 = vunpack.c.l.b16 %v365
          %v547 = vunpack.c.l.b16 %v366
          %v548 = vunpack.c.l.b16 %v367
          %v549 = vunpack.c.l.b16 %v368
          %v550 = vunpack.c.l.b16 %v369
          %v551 = vunpack.c.l.b16 %v370
          %v552 = vunpack.c.l.b16 %v371
          %v553 = vunpack.c.l.b16 %v372
          %v554 = vunpack.c.l.b16 %v373
          %v555 = vunpack.c.l.b16 %v374
          %v556 = vpack.c.b16 %v541, %v540
          %v557 = vpack.c.b16 %v543, %v542
          %v558 = vpack.c.b16 %v545, %v544
          %v559 = vpack.c.b16 %v547, %v546
          %v560 = vpack.c.b16 %v549, %v548
          %v561 = vpack.c.b16 %v551, %v550
          %v562 = vpack.c.b16 %v553, %v552
          %v563 = vpack.c.b16 %v555, %v554
          %572 = vmatprep.subr.bf16.mxu0 0
          %573 = vmatpush1.bf16.msra.mxu0 %v556
          %574 = vmatprep.subr.bf16.mxu0 0
          %575 = vmatpush1.bf16.msra.mxu0 %v557
          %576 = vmatprep.subr.bf16.mxu0 0
          %577 = vmatpush1.bf16.msra.mxu0 %v558
          %578 = vmatprep.subr.bf16.mxu0 0
          %579 = vmatpush1.bf16.msra.mxu0 %v559
          %580 = vmatprep.subr.bf16.mxu0 0
          %581 = vmatpush1.bf16.msra.mxu0 %v560
          %582 = vmatprep.subr.bf16.mxu0 0
          %583 = vmatpush1.bf16.msra.mxu0 %v561
          %584 = vmatprep.subr.bf16.mxu0 0
          %585 = vmatpush1.bf16.msra.mxu0 %v562
          %586 = vmatprep.subr.bf16.mxu0 0
          %587 = vmatpush1.bf16.msra.mxu0 %v563
          %588 = vmatprep.subr.bf16.mxu0 0
          %589 = vmatpush1.bf16.msra.mxu0 0
          %590 = vmatprep.subr.bf16.mxu0 0
          %591 = vmatpush1.bf16.msra.mxu0 0
          %592 = vmatprep.subr.bf16.mxu0 0
          %593 = vmatpush1.bf16.msra.mxu0 0
          %594 = vmatprep.subr.bf16.mxu0 0
          %595 = vmatpush1.bf16.msra.mxu0 0
          %596 = vmatprep.subr.bf16.mxu0 0
          %597 = vmatpush1.bf16.msra.mxu0 0
          %598 = vmatprep.subr.bf16.mxu0 0
          %599 = vmatpush1.bf16.msra.mxu0 0
          %600 = vmatprep.subr.bf16.mxu0 0
          %601 = vmatpush1.bf16.msra.mxu0 0
          %602 = vmatprep.subr.bf16.mxu0 0
          %603 = vmatpush1.bf16.msra.mxu0 0
          %604 = vmatprep.mubr.bf16.mxu0 0
          %605 = vmatmul.mubr.bf16.gmra.mrb[0].mxu0 %v339
          %v606 = vpop.f32.mrb[0].mxu0
          %v607 = vadd.f32 %v423, %v606
          %v608 = vpop.f32.mrb[0].mxu0
          %v609 = vpop.f32.mrb[0].mxu0
          %v610 = vpop.f32.mrb[0].mxu0
          %611 = vdwg.mxu0
          %v628 = vunpack.c.l.b16 %v375
          %v629 = vunpack.c.l.b16 %v376
          %v630 = vunpack.c.l.b16 %v377
          %v631 = vunpack.c.l.b16 %v378
          %v632 = vunpack.c.l.b16 %v379
          %v633 = vunpack.c.l.b16 %v380
          %v634 = vunpack.c.l.b16 %v381
          %v635 = vunpack.c.l.b16 %v382
          %v636 = vunpack.c.l.b16 %v383
          %v637 = vunpack.c.l.b16 %v384
          %v638 = vunpack.c.l.b16 %v385
          %v639 = vunpack.c.l.b16 %v386
          %v640 = vunpack.c.l.b16 %v387
          %v641 = vunpack.c.l.b16 %v388
          %v642 = vunpack.c.l.b16 %v389
          %v643 = vunpack.c.l.b16 %v390
          %v644 = vpack.c.b16 %v629, %v628
          %v645 = vpack.c.b16 %v631, %v630
          %v646 = vpack.c.b16 %v633, %v632
          %v647 = vpack.c.b16 %v635, %v634
          %v648 = vpack.c.b16 %v637, %v636
          %v649 = vpack.c.b16 %v639, %v638
          %v650 = vpack.c.b16 %v641, %v640
          %v651 = vpack.c.b16 %v643, %v642
          %660 = vmatprep.subr.bf16.mxu0 0
          %661 = vmatpush1.bf16.msra.mxu0 %v644
          %662 = vmatprep.subr.bf16.mxu0 0
          %663 = vmatpush1.bf16.msra.mxu0 %v645
          %664 = vmatprep.subr.bf16.mxu0 0
          %665 = vmatpush1.bf16.msra.mxu0 %v646
          %666 = vmatprep.subr.bf16.mxu0 0
          %667 = vmatpush1.bf16.msra.mxu0 %v647
          %668 = vmatprep.subr.bf16.mxu0 0
          %669 = vmatpush1.bf16.msra.mxu0 %v648
          %670 = vmatprep.subr.bf16.mxu0 0
          %671 = vmatpush1.bf16.msra.mxu0 %v649
          %672 = vmatprep.subr.bf16.mxu0 0
          %673 = vmatpush1.bf16.msra.mxu0 %v650
          %674 = vmatprep.subr.bf16.mxu0 0
          %675 = vmatpush1.bf16.msra.mxu0 %v651
          %676 = vmatprep.subr.bf16.mxu0 0
          %677 = vmatpush1.bf16.msra.mxu0 0
          %678 = vmatprep.subr.bf16.mxu0 0
          %679 = vmatpush1.bf16.msra.mxu0 0
          %680 = vmatprep.subr.bf16.mxu0 0
          %681 = vmatpush1.bf16.msra.mxu0 0
          %682 = vmatprep.subr.bf16.mxu0 0
          %683 = vmatpush1.bf16.msra.mxu0 0
          %684 = vmatprep.subr.bf16.mxu0 0
          %685 = vmatpush1.bf16.msra.mxu0 0
          %686 = vmatprep.subr.bf16.mxu0 0
          %687 = vmatpush1.bf16.msra.mxu0 0
          %688 = vmatprep.subr.bf16.mxu0 0
          %689 = vmatpush1.bf16.msra.mxu0 0
          %690 = vmatprep.subr.bf16.mxu0 0
          %691 = vmatpush1.bf16.msra.mxu0 0
          %692 = vmatprep.mubr.bf16.mxu0 0
          %693 = vmatmul.mubr.bf16.gmra.mrb[0].mxu0 %v339
          %v694 = vpop.f32.mrb[0].mxu0
          %v695 = vadd.f32 %v427, %v694
          %v696 = vpop.f32.mrb[0].mxu0
          %v697 = vpop.f32.mrb[0].mxu0
          %v698 = vpop.f32.mrb[0].mxu0
          %699 = vdwg.mxu0
          %v716 = vunpack.c.l.b16 %v391
          %v717 = vunpack.c.l.b16 %v392
          %v718 = vunpack.c.l.b16 %v393
          %v719 = vunpack.c.l.b16 %v394
          %v720 = vunpack.c.l.b16 %v395
          %v721 = vunpack.c.l.b16 %v396
          %v722 = vunpack.c.l.b16 %v397
          %v723 = vunpack.c.l.b16 %v398
          %v724 = vunpack.c.l.b16 %v399
          %v725 = vunpack.c.l.b16 %v400
          %v726 = vunpack.c.l.b16 %v401
          %v727 = vunpack.c.l.b16 %v402
          %v728 = vunpack.c.l.b16 %v403
          %v729 = vunpack.c.l.b16 %v404
          %v730 = vunpack.c.l.b16 %v405
          %v731 = vunpack.c.l.b16 %v406
          %v732 = vpack.c.b16 %v717, %v716
          %v733 = vpack.c.b16 %v719, %v718
          %v734 = vpack.c.b16 %v721, %v720
          %v735 = vpack.c.b16 %v723, %v722
          %v736 = vpack.c.b16 %v725, %v724
          %v737 = vpack.c.b16 %v727, %v726
          %v738 = vpack.c.b16 %v729, %v728
          %v739 = vpack.c.b16 %v731, %v730
          %748 = vmatprep.subr.bf16.mxu0 0
          %749 = vmatpush1.bf16.msra.mxu0 %v732
          %750 = vmatprep.subr.bf16.mxu0 0
          %751 = vmatpush1.bf16.msra.mxu0 %v733
          %752 = vmatprep.subr.bf16.mxu0 0
          %753 = vmatpush1.bf16.msra.mxu0 %v734
          %754 = vmatprep.subr.bf16.mxu0 0
          %755 = vmatpush1.bf16.msra.mxu0 %v735
          %756 = vmatprep.subr.bf16.mxu0 0
          %757 = vmatpush1.bf16.msra.mxu0 %v736
          %758 = vmatprep.subr.bf16.mxu0 0
          %759 = vmatpush1.bf16.msra.mxu0 %v737
          %760 = vmatprep.subr.bf16.mxu0 0
          %761 = vmatpush1.bf16.msra.mxu0 %v738
          %762 = vmatprep.subr.bf16.mxu0 0
          %763 = vmatpush1.bf16.msra.mxu0 %v739
          %764 = vmatprep.subr.bf16.mxu0 0
          %765 = vmatpush1.bf16.msra.mxu0 0
          %766 = vmatprep.subr.bf16.mxu0 0
          %767 = vmatpush1.bf16.msra.mxu0 0
          %768 = vmatprep.subr.bf16.mxu0 0
          %769 = vmatpush1.bf16.msra.mxu0 0
          %770 = vmatprep.subr.bf16.mxu0 0
          %771 = vmatpush1.bf16.msra.mxu0 0
          %772 = vmatprep.subr.bf16.mxu0 0
          %773 = vmatpush1.bf16.msra.mxu0 0
          %774 = vmatprep.subr.bf16.mxu0 0
          %775 = vmatpush1.bf16.msra.mxu0 0
          %776 = vmatprep.subr.bf16.mxu0 0
          %777 = vmatpush1.bf16.msra.mxu0 0
          %778 = vmatprep.subr.bf16.mxu0 0
          %779 = vmatpush1.bf16.msra.mxu0 0
          %780 = vmatprep.mubr.bf16.mxu0 0
          %781 = vmatmul.mubr.bf16.gmra.mrb[0].mxu0 %v339
          %v782 = vpop.f32.mrb[0].mxu0
          %v783 = vadd.f32 %v431, %v782
          %v784 = vpop.f32.mrb[0].mxu0
          %v785 = vpop.f32.mrb[0].mxu0
          %v786 = vpop.f32.mrb[0].mxu0
          %787 = vdwg.mxu0
          %s788 = scalar_lea.vmem %s3, 512
          %v789 = vld [vmem:[%s788] sm:$0xf]
          %v790 = vld [vmem:[%s788 + $0x4] sm:$0xf]
          %v791 = vld [vmem:[%s788 + $0x8] sm:$0xf]
          %v792 = vld [vmem:[%s788 + $0xc] sm:$0xf]
          %v793 = vld [vmem:[%s788 + $0x10] sm:$0xf]
          %v794 = vld [vmem:[%s788 + $0x14] sm:$0xf]
          %v795 = vld [vmem:[%s788 + $0x18] sm:$0xf]
          %v796 = vld [vmem:[%s788 + $0x1c] sm:$0xf]
          %v797 = vld [vmem:[%s788 + $0x20] sm:$0xf]
          %v798 = vld [vmem:[%s788 + $0x24] sm:$0xf]
          %v799 = vld [vmem:[%s788 + $0x28] sm:$0xf]
          %v800 = vld [vmem:[%s788 + $0x2c] sm:$0xf]
          %v801 = vld [vmem:[%s788 + $0x30] sm:$0xf]
          %v802 = vld [vmem:[%s788 + $0x34] sm:$0xf]
          %v803 = vld [vmem:[%s788 + $0x38] sm:$0xf]
          %v804 = vld [vmem:[%s788 + $0x3c] sm:$0xf]
          %v805 = vld [vmem:[%s788 + $0x40] sm:$0xf]
          %v806 = vld [vmem:[%s788 + $0x44] sm:$0xf]
          %v807 = vld [vmem:[%s788 + $0x48] sm:$0xf]
          %v808 = vld [vmem:[%s788 + $0x4c] sm:$0xf]
          %v809 = vld [vmem:[%s788 + $0x50] sm:$0xf]
          %v810 = vld [vmem:[%s788 + $0x54] sm:$0xf]
          %v811 = vld [vmem:[%s788 + $0x58] sm:$0xf]
          %v812 = vld [vmem:[%s788 + $0x5c] sm:$0xf]
          %v813 = vld [vmem:[%s788 + $0x60] sm:$0xf]
          %v814 = vld [vmem:[%s788 + $0x64] sm:$0xf]
          %v815 = vld [vmem:[%s788 + $0x68] sm:$0xf]
          %v816 = vld [vmem:[%s788 + $0x6c] sm:$0xf]
          %v817 = vld [vmem:[%s788 + $0x70] sm:$0xf]
          %v818 = vld [vmem:[%s788 + $0x74] sm:$0xf]
          %v819 = vld [vmem:[%s788 + $0x78] sm:$0xf]
          %v820 = vld [vmem:[%s788 + $0x7c] sm:$0xf]
          %v821 = vld [vmem:[%s788 + $0x80] sm:$0xf]
          %v822 = vld [vmem:[%s788 + $0x84] sm:$0xf]
          %v823 = vld [vmem:[%s788 + $0x88] sm:$0xf]
          %v824 = vld [vmem:[%s788 + $0x8c] sm:$0xf]
          %v825 = vld [vmem:[%s788 + $0x90] sm:$0xf]
          %v826 = vld [vmem:[%s788 + $0x94] sm:$0xf]
          %v827 = vld [vmem:[%s788 + $0x98] sm:$0xf]
          %v828 = vld [vmem:[%s788 + $0x9c] sm:$0xf]
          %v829 = vld [vmem:[%s788 + $0xa0] sm:$0xf]
          %v830 = vld [vmem:[%s788 + $0xa4] sm:$0xf]
          %v831 = vld [vmem:[%s788 + $0xa8] sm:$0xf]
          %v832 = vld [vmem:[%s788 + $0xac] sm:$0xf]
          %v833 = vld [vmem:[%s788 + $0xb0] sm:$0xf]
          %v834 = vld [vmem:[%s788 + $0xb4] sm:$0xf]
          %v835 = vld [vmem:[%s788 + $0xb8] sm:$0xf]
          %v836 = vld [vmem:[%s788 + $0xbc] sm:$0xf]
          %v837 = vld [vmem:[%s788 + $0xc0] sm:$0xf]
          %v838 = vld [vmem:[%s788 + $0xc4] sm:$0xf]
          %v839 = vld [vmem:[%s788 + $0xc8] sm:$0xf]
          %v840 = vld [vmem:[%s788 + $0xcc] sm:$0xf]
          %v841 = vld [vmem:[%s788 + $0xd0] sm:$0xf]
          %v842 = vld [vmem:[%s788 + $0xd4] sm:$0xf]
          %v843 = vld [vmem:[%s788 + $0xd8] sm:$0xf]
          %v844 = vld [vmem:[%s788 + $0xdc] sm:$0xf]
          %v845 = vld [vmem:[%s788 + $0xe0] sm:$0xf]
          %v846 = vld [vmem:[%s788 + $0xe4] sm:$0xf]
          %v847 = vld [vmem:[%s788 + $0xe8] sm:$0xf]
          %v848 = vld [vmem:[%s788 + $0xec] sm:$0xf]
          %v849 = vld [vmem:[%s788 + $0xf0] sm:$0xf]
          %v850 = vld [vmem:[%s788 + $0xf4] sm:$0xf]
          %v851 = vld [vmem:[%s788 + $0xf8] sm:$0xf]
          %v852 = vld [vmem:[%s788 + $0xfc] sm:$0xf]
          %s853 = scalar_lea.vmem %s4, 8
          %v854 = vld [vmem:[%s853] sm:$0x1]
          %v855 = vld [vmem:[%s853 + $0x1] sm:$0x1]
          %v856 = vld [vmem:[%s853 + $0x2] sm:$0x1]
          %v857 = vld [vmem:[%s853 + $0x3] sm:$0x1]
          %v862 = vlaneseq
          %v863 = vshrl.u32 %v862, 7
          %v864 = vsub.s32 0, %v863
          %v865 = vrot.slane %v854, %v864
          %v866 = vlaneseq
          %v867 = vshrl.u32 %v866, 7
          %v868 = vsub.s32 0, %v867
          %v869 = vrot.slane %v855, %v868
          %v870 = vlaneseq
          %v871 = vshrl.u32 %v870, 7
          %v872 = vsub.s32 0, %v871
          %v873 = vrot.slane %v856, %v872
          %v874 = vlaneseq
          %v875 = vshrl.u32 %v874, 7
          %v876 = vsub.s32 0, %v875
          %v877 = vrot.slane %v857, %v876
          %v898 = vunpack.c.l.b16 %v789
          %v899 = vunpack.c.l.b16 %v790
          %v900 = vunpack.c.l.b16 %v791
          %v901 = vunpack.c.l.b16 %v792
          %v902 = vunpack.c.l.b16 %v793
          %v903 = vunpack.c.l.b16 %v794
          %v904 = vunpack.c.l.b16 %v795
          %v905 = vunpack.c.l.b16 %v796
          %v906 = vunpack.c.l.b16 %v797
          %v907 = vunpack.c.l.b16 %v798
          %v908 = vunpack.c.l.b16 %v799
          %v909 = vunpack.c.l.b16 %v800
          %v910 = vunpack.c.l.b16 %v801
          %v911 = vunpack.c.l.b16 %v802
          %v912 = vunpack.c.l.b16 %v803
          %v913 = vunpack.c.l.b16 %v804
          %v914 = vpack.c.b16 %v899, %v898
          %v915 = vpack.c.b16 %v901, %v900
          %v916 = vpack.c.b16 %v903, %v902
          %v917 = vpack.c.b16 %v905, %v904
          %v918 = vpack.c.b16 %v907, %v906
          %v919 = vpack.c.b16 %v909, %v908
          %v920 = vpack.c.b16 %v911, %v910
          %v921 = vpack.c.b16 %v913, %v912
          %930 = vmatprep.subr.bf16.mxu0 0
          %931 = vmatpush1.bf16.msra.mxu0 %v914
          %932 = vmatprep.subr.bf16.mxu0 0
          %933 = vmatpush1.bf16.msra.mxu0 %v915
          %934 = vmatprep.subr.bf16.mxu0 0
          %935 = vmatpush1.bf16.msra.mxu0 %v916
          %936 = vmatprep.subr.bf16.mxu0 0
          %937 = vmatpush1.bf16.msra.mxu0 %v917
          %938 = vmatprep.subr.bf16.mxu0 0
          %939 = vmatpush1.bf16.msra.mxu0 %v918
          %940 = vmatprep.subr.bf16.mxu0 0
          %941 = vmatpush1.bf16.msra.mxu0 %v919
          %942 = vmatprep.subr.bf16.mxu0 0
          %943 = vmatpush1.bf16.msra.mxu0 %v920
          %944 = vmatprep.subr.bf16.mxu0 0
          %945 = vmatpush1.bf16.msra.mxu0 %v921
          %946 = vmatprep.subr.bf16.mxu0 0
          %947 = vmatpush1.bf16.msra.mxu0 0
          %948 = vmatprep.subr.bf16.mxu0 0
          %949 = vmatpush1.bf16.msra.mxu0 0
          %950 = vmatprep.subr.bf16.mxu0 0
          %951 = vmatpush1.bf16.msra.mxu0 0
          %952 = vmatprep.subr.bf16.mxu0 0
          %953 = vmatpush1.bf16.msra.mxu0 0
          %954 = vmatprep.subr.bf16.mxu0 0
          %955 = vmatpush1.bf16.msra.mxu0 0
          %956 = vmatprep.subr.bf16.mxu0 0
          %957 = vmatpush1.bf16.msra.mxu0 0
          %958 = vmatprep.subr.bf16.mxu0 0
          %959 = vmatpush1.bf16.msra.mxu0 0
          %960 = vmatprep.subr.bf16.mxu0 0
          %961 = vmatpush1.bf16.msra.mxu0 0
          %962 = vmatprep.mubr.bf16.mxu0 0
          %963 = vmatmul.mubr.bf16.gmra.mrb[0].mxu0 %v341
          %v964 = vpop.f32.mrb[0].mxu0
          %v965 = vadd.f32 %v865, %v964
          %v966 = vpop.f32.mrb[0].mxu0
          %v967 = vpop.f32.mrb[0].mxu0
          %v968 = vpop.f32.mrb[0].mxu0
          %969 = vdwg.mxu0
          %v986 = vunpack.c.l.b16 %v805
          %v987 = vunpack.c.l.b16 %v806
          %v988 = vunpack.c.l.b16 %v807
          %v989 = vunpack.c.l.b16 %v808
          %v990 = vunpack.c.l.b16 %v809
          %v991 = vunpack.c.l.b16 %v810
          %v992 = vunpack.c.l.b16 %v811
          %v993 = vunpack.c.l.b16 %v812
          %v994 = vunpack.c.l.b16 %v813
          %v995 = vunpack.c.l.b16 %v814
          %v996 = vunpack.c.l.b16 %v815
          %v997 = vunpack.c.l.b16 %v816
          %v998 = vunpack.c.l.b16 %v817
          %v999 = vunpack.c.l.b16 %v818
          %v1000 = vunpack.c.l.b16 %v819
          %v1001 = vunpack.c.l.b16 %v820
          %v1002 = vpack.c.b16 %v987, %v986
          %v1003 = vpack.c.b16 %v989, %v988
          %v1004 = vpack.c.b16 %v991, %v990
          %v1005 = vpack.c.b16 %v993, %v992
          %v1006 = vpack.c.b16 %v995, %v994
          %v1007 = vpack.c.b16 %v997, %v996
          %v1008 = vpack.c.b16 %v999, %v998
          %v1009 = vpack.c.b16 %v1001, %v1000
          %1018 = vmatprep.subr.bf16.mxu0 0
          %1019 = vmatpush1.bf16.msra.mxu0 %v1002
          %1020 = vmatprep.subr.bf16.mxu0 0
          %1021 = vmatpush1.bf16.msra.mxu0 %v1003
          %1022 = vmatprep.subr.bf16.mxu0 0
          %1023 = vmatpush1.bf16.msra.mxu0 %v1004
          %1024 = vmatprep.subr.bf16.mxu0 0
          %1025 = vmatpush1.bf16.msra.mxu0 %v1005
          %1026 = vmatprep.subr.bf16.mxu0 0
          %1027 = vmatpush1.bf16.msra.mxu0 %v1006
          %1028 = vmatprep.subr.bf16.mxu0 0
          %1029 = vmatpush1.bf16.msra.mxu0 %v1007
          %1030 = vmatprep.subr.bf16.mxu0 0
          %1031 = vmatpush1.bf16.msra.mxu0 %v1008
          %1032 = vmatprep.subr.bf16.mxu0 0
          %1033 = vmatpush1.bf16.msra.mxu0 %v1009
          %1034 = vmatprep.subr.bf16.mxu0 0
          %1035 = vmatpush1.bf16.msra.mxu0 0
          %1036 = vmatprep.subr.bf16.mxu0 0
          %1037 = vmatpush1.bf16.msra.mxu0 0
          %1038 = vmatprep.subr.bf16.mxu0 0
          %1039 = vmatpush1.bf16.msra.mxu0 0
          %1040 = vmatprep.subr.bf16.mxu0 0
          %1041 = vmatpush1.bf16.msra.mxu0 0
          %1042 = vmatprep.subr.bf16.mxu0 0
          %1043 = vmatpush1.bf16.msra.mxu0 0
          %1044 = vmatprep.subr.bf16.mxu0 0
          %1045 = vmatpush1.bf16.msra.mxu0 0
          %1046 = vmatprep.subr.bf16.mxu0 0
          %1047 = vmatpush1.bf16.msra.mxu0 0
          %1048 = vmatprep.subr.bf16.mxu0 0
          %1049 = vmatpush1.bf16.msra.mxu0 0
          %1050 = vmatprep.mubr.bf16.mxu0 0
          %1051 = vmatmul.mubr.bf16.gmra.mrb[0].mxu0 %v341
          %v1052 = vpop.f32.mrb[0].mxu0
          %v1053 = vadd.f32 %v869, %v1052
          %v1054 = vpop.f32.mrb[0].mxu0
          %v1055 = vpop.f32.mrb[0].mxu0
          %v1056 = vpop.f32.mrb[0].mxu0
          %1057 = vdwg.mxu0
          %v1074 = vunpack.c.l.b16 %v821
          %v1075 = vunpack.c.l.b16 %v822
          %v1076 = vunpack.c.l.b16 %v823
          %v1077 = vunpack.c.l.b16 %v824
          %v1078 = vunpack.c.l.b16 %v825
          %v1079 = vunpack.c.l.b16 %v826
          %v1080 = vunpack.c.l.b16 %v827
          %v1081 = vunpack.c.l.b16 %v828
          %v1082 = vunpack.c.l.b16 %v829
          %v1083 = vunpack.c.l.b16 %v830
          %v1084 = vunpack.c.l.b16 %v831
          %v1085 = vunpack.c.l.b16 %v832
          %v1086 = vunpack.c.l.b16 %v833
          %v1087 = vunpack.c.l.b16 %v834
          %v1088 = vunpack.c.l.b16 %v835
          %v1089 = vunpack.c.l.b16 %v836
          %v1090 = vpack.c.b16 %v1075, %v1074
          %v1091 = vpack.c.b16 %v1077, %v1076
          %v1092 = vpack.c.b16 %v1079, %v1078
          %v1093 = vpack.c.b16 %v1081, %v1080
          %v1094 = vpack.c.b16 %v1083, %v1082
          %v1095 = vpack.c.b16 %v1085, %v1084
          %v1096 = vpack.c.b16 %v1087, %v1086
          %v1097 = vpack.c.b16 %v1089, %v1088
          %1106 = vmatprep.subr.bf16.mxu0 0
          %1107 = vmatpush1.bf16.msra.mxu0 %v1090
          %1108 = vmatprep.subr.bf16.mxu0 0
          %1109 = vmatpush1.bf16.msra.mxu0 %v1091
          %1110 = vmatprep.subr.bf16.mxu0 0
          %1111 = vmatpush1.bf16.msra.mxu0 %v1092
          %1112 = vmatprep.subr.bf16.mxu0 0
          %1113 = vmatpush1.bf16.msra.mxu0 %v1093
          %1114 = vmatprep.subr.bf16.mxu0 0
          %1115 = vmatpush1.bf16.msra.mxu0 %v1094
          %1116 = vmatprep.subr.bf16.mxu0 0
          %1117 = vmatpush1.bf16.msra.mxu0 %v1095
          %1118 = vmatprep.subr.bf16.mxu0 0
          %1119 = vmatpush1.bf16.msra.mxu0 %v1096
          %1120 = vmatprep.subr.bf16.mxu0 0
          %1121 = vmatpush1.bf16.msra.mxu0 %v1097
          %1122 = vmatprep.subr.bf16.mxu0 0
          %1123 = vmatpush1.bf16.msra.mxu0 0
          %1124 = vmatprep.subr.bf16.mxu0 0
          %1125 = vmatpush1.bf16.msra.mxu0 0
          %1126 = vmatprep.subr.bf16.mxu0 0
          %1127 = vmatpush1.bf16.msra.mxu0 0
          %1128 = vmatprep.subr.bf16.mxu0 0
          %1129 = vmatpush1.bf16.msra.mxu0 0
          %1130 = vmatprep.subr.bf16.mxu0 0
          %1131 = vmatpush1.bf16.msra.mxu0 0
          %1132 = vmatprep.subr.bf16.mxu0 0
          %1133 = vmatpush1.bf16.msra.mxu0 0
          %1134 = vmatprep.subr.bf16.mxu0 0
          %1135 = vmatpush1.bf16.msra.mxu0 0
          %1136 = vmatprep.subr.bf16.mxu0 0
          %1137 = vmatpush1.bf16.msra.mxu0 0
          %1138 = vmatprep.mubr.bf16.mxu0 0
          %1139 = vmatmul.mubr.bf16.gmra.mrb[0].mxu0 %v341
          %v1140 = vpop.f32.mrb[0].mxu0
          %v1141 = vadd.f32 %v873, %v1140
          %v1142 = vpop.f32.mrb[0].mxu0
          %v1143 = vpop.f32.mrb[0].mxu0
          %v1144 = vpop.f32.mrb[0].mxu0
          %1145 = vdwg.mxu0
          %v1162 = vunpack.c.l.b16 %v837
          %v1163 = vunpack.c.l.b16 %v838
          %v1164 = vunpack.c.l.b16 %v839
          %v1165 = vunpack.c.l.b16 %v840
          %v1166 = vunpack.c.l.b16 %v841
          %v1167 = vunpack.c.l.b16 %v842
          %v1168 = vunpack.c.l.b16 %v843
          %v1169 = vunpack.c.l.b16 %v844
          %v1170 = vunpack.c.l.b16 %v845
          %v1171 = vunpack.c.l.b16 %v846
          %v1172 = vunpack.c.l.b16 %v847
          %v1173 = vunpack.c.l.b16 %v848
          %v1174 = vunpack.c.l.b16 %v849
          %v1175 = vunpack.c.l.b16 %v850
          %v1176 = vunpack.c.l.b16 %v851
          %v1177 = vunpack.c.l.b16 %v852
          %v1178 = vpack.c.b16 %v1163, %v1162
          %v1179 = vpack.c.b16 %v1165, %v1164
          %v1180 = vpack.c.b16 %v1167, %v1166
          %v1181 = vpack.c.b16 %v1169, %v1168
          %v1182 = vpack.c.b16 %v1171, %v1170
          %v1183 = vpack.c.b16 %v1173, %v1172
          %v1184 = vpack.c.b16 %v1175, %v1174
          %v1185 = vpack.c.b16 %v1177, %v1176
          %1194 = vmatprep.subr.bf16.mxu0 0
          %1195 = vmatpush1.bf16.msra.mxu0 %v1178
          %1196 = vmatprep.subr.bf16.mxu0 0
          %1197 = vmatpush1.bf16.msra.mxu0 %v1179
          %1198 = vmatprep.subr.bf16.mxu0 0
          %1199 = vmatpush1.bf16.msra.mxu0 %v1180
          %1200 = vmatprep.subr.bf16.mxu0 0
          %1201 = vmatpush1.bf16.msra.mxu0 %v1181
          %1202 = vmatprep.subr.bf16.mxu0 0
          %1203 = vmatpush1.bf16.msra.mxu0 %v1182
          %1204 = vmatprep.subr.bf16.mxu0 0
          %1205 = vmatpush1.bf16.msra.mxu0 %v1183
          %1206 = vmatprep.subr.bf16.mxu0 0
          %1207 = vmatpush1.bf16.msra.mxu0 %v1184
          %1208 = vmatprep.subr.bf16.mxu0 0
          %1209 = vmatpush1.bf16.msra.mxu0 %v1185
          %1210 = vmatprep.subr.bf16.mxu0 0
          %1211 = vmatpush1.bf16.msra.mxu0 0
          %1212 = vmatprep.subr.bf16.mxu0 0
          %1213 = vmatpush1.bf16.msra.mxu0 0
          %1214 = vmatprep.subr.bf16.mxu0 0
          %1215 = vmatpush1.bf16.msra.mxu0 0
          %1216 = vmatprep.subr.bf16.mxu0 0
          %1217 = vmatpush1.bf16.msra.mxu0 0
          %1218 = vmatprep.subr.bf16.mxu0 0
          %1219 = vmatpush1.bf16.msra.mxu0 0
          %1220 = vmatprep.subr.bf16.mxu0 0
          %1221 = vmatpush1.bf16.msra.mxu0 0
          %1222 = vmatprep.subr.bf16.mxu0 0
          %1223 = vmatpush1.bf16.msra.mxu0 0
          %1224 = vmatprep.subr.bf16.mxu0 0
          %1225 = vmatpush1.bf16.msra.mxu0 0
          %1226 = vmatprep.mubr.bf16.mxu0 0
          %1227 = vmatmul.mubr.bf16.gmra.mrb[0].mxu0 %v341
          %v1228 = vpop.f32.mrb[0].mxu0
          %v1229 = vadd.f32 %v877, %v1228
          %v1230 = vpop.f32.mrb[0].mxu0
          %v1231 = vpop.f32.mrb[0].mxu0
          %v1232 = vpop.f32.mrb[0].mxu0
          %1233 = vdwg.mxu0
          %v1234 = vpack.c.bf16 %v519, %v519
          %v1235 = vpack.c.bf16 %v607, %v607
          %v1236 = vpack.c.bf16 %v695, %v695
          %v1237 = vpack.c.bf16 %v783, %v783
          %vm1238 = vcmask 257024
          %1239 = vst.msk [vmem:[#allocation2] sm:$0xf] %vm1238, %v1234
          %1240 = vst.msk [vmem:[#allocation2 + $0x4] sm:$0xf] %vm1238, %v1235
          %1241 = vst.msk [vmem:[#allocation2 + $0x8] sm:$0xf] %vm1238, %v1236
          %1242 = vst.msk [vmem:[#allocation2 + $0xc] sm:$0xf] %vm1238, %v1237
          %v1243 = vpack.c.bf16 %v965, %v965
          %v1244 = vpack.c.bf16 %v1053, %v1053
          %v1245 = vpack.c.bf16 %v1141, %v1141
          %v1246 = vpack.c.bf16 %v1229, %v1229
          %1247 = vst.msk [vmem:[#allocation3] sm:$0xf] %vm1238, %v1243
          %1248 = vst.msk [vmem:[#allocation3 + $0x4] sm:$0xf] %vm1238, %v1244
          %1249 = vst.msk [vmem:[#allocation3 + $0x8] sm:$0xf] %vm1238, %v1245
          %1250 = vst.msk [vmem:[#allocation3 + $0xc] sm:$0xf] %vm1238, %v1246
        $region52: #{tpu_custom_call.1} parent=47 // pred_fallthru
          _
        %v1251 = vld [vmem:[%s324] sm:$0xff]
        %v1252 = vpack.c.bf16 %v1251, %v1251
        %v1253 = vld [vmem:[%s3] sm:$0xf]
        %v1254 = vld [vmem:[%s3 + $0x4] sm:$0xf]
        %v1255 = vld [vmem:[%s3 + $0x8] sm:$0xf]
        %v1256 = vld [vmem:[%s3 + $0xc] sm:$0xf]
        %v1257 = vld [vmem:[%s3 + $0x10] sm:$0xf]
        %v1258 = vld [vmem:[%s3 + $0x14] sm:$0xf]
        %v1259 = vld [vmem:[%s3 + $0x18] sm:$0xf]
        %v1260 = vld [vmem:[%s3 + $0x1c] sm:$0xf]
        %v1261 = vld [vmem:[%s3 + $0x20] sm:$0xf]
        %v1262 = vld [vmem:[%s3 + $0x24] sm:$0xf]
        %v1263 = vld [vmem:[%s3 + $0x28] sm:$0xf]
        %v1264 = vld [vmem:[%s3 + $0x2c] sm:$0xf]
        %v1265 = vld [vmem:[%s3 + $0x30] sm:$0xf]
        %v1266 = vld [vmem:[%s3 + $0x34] sm:$0xf]
        %v1267 = vld [vmem:[%s3 + $0x38] sm:$0xf]
        %v1268 = vld [vmem:[%s3 + $0x3c] sm:$0xf]
        %v1269 = vld [vmem:[%s3 + $0x40] sm:$0xf]
        %v1270 = vld [vmem:[%s3 + $0x44] sm:$0xf]
        %v1271 = vld [vmem:[%s3 + $0x48] sm:$0xf]
        %v1272 = vld [vmem:[%s3 + $0x4c] sm:$0xf]
        %v1273 = vld [vmem:[%s3 + $0x50] sm:$0xf]
        %v1274 = vld [vmem:[%s3 + $0x54] sm:$0xf]
        %v1275 = vld [vmem:[%s3 + $0x58] sm:$0xf]
        %v1276 = vld [vmem:[%s3 + $0x5c] sm:$0xf]
        %v1277 = vld [vmem:[%s3 + $0x60] sm:$0xf]
        %v1278 = vld [vmem:[%s3 + $0x64] sm:$0xf]
        %v1279 = vld [vmem:[%s3 + $0x68] sm:$0xf]
        %v1280 = vld [vmem:[%s3 + $0x6c] sm:$0xf]
        %v1281 = vld [vmem:[%s3 + $0x70] sm:$0xf]
        %v1282 = vld [vmem:[%s3 + $0x74] sm:$0xf]
        %v1283 = vld [vmem:[%s3 + $0x78] sm:$0xf]
        %v1284 = vld [vmem:[%s3 + $0x7c] sm:$0xf]
        %v1285 = vld [vmem:[%s3 + $0x80] sm:$0xf]
        %v1286 = vld [vmem:[%s3 + $0x84] sm:$0xf]
        %v1287 = vld [vmem:[%s3 + $0x88] sm:$0xf]
        %v1288 = vld [vmem:[%s3 + $0x8c] sm:$0xf]
        %v1289 = vld [vmem:[%s3 + $0x90] sm:$0xf]
        %v1290 = vld [vmem:[%s3 + $0x94] sm:$0xf]
        %v1291 = vld [vmem:[%s3 + $0x98] sm:$0xf]
        %v1292 = vld [vmem:[%s3 + $0x9c] sm:$0xf]
        %v1293 = vld [vmem:[%s3 + $0xa0] sm:$0xf]
        %v1294 = vld [vmem:[%s3 + $0xa4] sm:$0xf]
        %v1295 = vld [vmem:[%s3 + $0xa8] sm:$0xf]
        %v1296 = vld [vmem:[%s3 + $0xac] sm:$0xf]
        %v1297 = vld [vmem:[%s3 + $0xb0] sm:$0xf]
        %v1298 = vld [vmem:[%s3 + $0xb4] sm:$0xf]
        %v1299 = vld [vmem:[%s3 + $0xb8] sm:$0xf]
        %v1300 = vld [vmem:[%s3 + $0xbc] sm:$0xf]
        %v1301 = vld [vmem:[%s3 + $0xc0] sm:$0xf]
        %v1302 = vld [vmem:[%s3 + $0xc4] sm:$0xf]
        %v1303 = vld [vmem:[%s3 + $0xc8] sm:$0xf]
        %v1304 = vld [vmem:[%s3 + $0xcc] sm:$0xf]
        %v1305 = vld [vmem:[%s3 + $0xd0] sm:$0xf]
        %v1306 = vld [vmem:[%s3 + $0xd4] sm:$0xf]
        %v1307 = vld [vmem:[%s3 + $0xd8] sm:$0xf]
        %v1308 = vld [vmem:[%s3 + $0xdc] sm:$0xf]
        %v1309 = vld [vmem:[%s3 + $0xe0] sm:$0xf]
        %v1310 = vld [vmem:[%s3 + $0xe4] sm:$0xf]
        %v1311 = vld [vmem:[%s3 + $0xe8] sm:$0xf]
        %v1312 = vld [vmem:[%s3 + $0xec] sm:$0xf]
        %v1313 = vld [vmem:[%s3 + $0xf0] sm:$0xf]
        %v1314 = vld [vmem:[%s3 + $0xf4] sm:$0xf]
        %v1315 = vld [vmem:[%s3 + $0xf8] sm:$0xf]
        %v1316 = vld [vmem:[%s3 + $0xfc] sm:$0xf]
        %v1317 = vld [vmem:[%s4] sm:$0x1]
        %v1318 = vld [vmem:[%s4 + $0x1] sm:$0x1]
        %v1319 = vld [vmem:[%s4 + $0x2] sm:$0x1]
        %v1320 = vld [vmem:[%s4 + $0x3] sm:$0x1]
        %v1325 = vlaneseq
        %v1326 = vshrl.u32 %v1325, 7
        %v1327 = vsub.s32 0, %v1326
        %v1328 = vrot.slane %v1317, %v1327
        %v1329 = vlaneseq
        %v1330 = vshrl.u32 %v1329, 7
        %v1331 = vsub.s32 0, %v1330
        %v1332 = vrot.slane %v1318, %v1331
        %v1333 = vlaneseq
        %v1334 = vshrl.u32 %v1333, 7
        %v1335 = vsub.s32 0, %v1334
        %v1336 = vrot.slane %v1319, %v1335
        %v1337 = vlaneseq
        %v1338 = vshrl.u32 %v1337, 7
        %v1339 = vsub.s32 0, %v1338
        %v1340 = vrot.slane %v1320, %v1339
        %v1361 = vunpack.c.l.b16 %v1253
        %v1362 = vunpack.c.l.b16 %v1254
        %v1363 = vunpack.c.l.b16 %v1255
        %v1364 = vunpack.c.l.b16 %v1256
        %v1365 = vunpack.c.l.b16 %v1257
        %v1366 = vunpack.c.l.b16 %v1258
        %v1367 = vunpack.c.l.b16 %v1259
        %v1368 = vunpack.c.l.b16 %v1260
        %v1369 = vunpack.c.l.b16 %v1261
        %v1370 = vunpack.c.l.b16 %v1262
        %v1371 = vunpack.c.l.b16 %v1263
        %v1372 = vunpack.c.l.b16 %v1264
        %v1373 = vunpack.c.l.b16 %v1265
        %v1374 = vunpack.c.l.b16 %v1266
        %v1375 = vunpack.c.l.b16 %v1267
        %v1376 = vunpack.c.l.b16 %v1268
        %v1377 = vpack.c.b16 %v1362, %v1361
        %v1378 = vpack.c.b16 %v1364, %v1363
        %v1379 = vpack.c.b16 %v1366, %v1365
        %v1380 = vpack.c.b16 %v1368, %v1367
        %v1381 = vpack.c.b16 %v1370, %v1369
        %v1382 = vpack.c.b16 %v1372, %v1371
        %v1383 = vpack.c.b16 %v1374, %v1373
        %v1384 = vpack.c.b16 %v1376, %v1375
        %1393 = vmatprep.subr.bf16.mxu0 0
        %1394 = vmatpush1.bf16.msra.mxu0 %v1377
        %1395 = vmatprep.subr.bf16.mxu0 0
        %1396 = vmatpush1.bf16.msra.mxu0 %v1378
        %1397 = vmatprep.subr.bf16.mxu0 0
        %1398 = vmatpush1.bf16.msra.mxu0 %v1379
        %1399 = vmatprep.subr.bf16.mxu0 0
        %1400 = vmatpush1.bf16.msra.mxu0 %v1380
        %1401 = vmatprep.subr.bf16.mxu0 0
        %1402 = vmatpush1.bf16.msra.mxu0 %v1381
        %1403 = vmatprep.subr.bf16.mxu0 0
        %1404 = vmatpush1.bf16.msra.mxu0 %v1382
        %1405 = vmatprep.subr.bf16.mxu0 0
        %1406 = vmatpush1.bf16.msra.mxu0 %v1383
        %1407 = vmatprep.subr.bf16.mxu0 0
        %1408 = vmatpush1.bf16.msra.mxu0 %v1384
        %1409 = vmatprep.subr.bf16.mxu0 0
        %1410 = vmatpush1.bf16.msra.mxu0 0
        %1411 = vmatprep.subr.bf16.mxu0 0
        %1412 = vmatpush1.bf16.msra.mxu0 0
        %1413 = vmatprep.subr.bf16.mxu0 0
        %1414 = vmatpush1.bf16.msra.mxu0 0
        %1415 = vmatprep.subr.bf16.mxu0 0
        %1416 = vmatpush1.bf16.msra.mxu0 0
        %1417 = vmatprep.subr.bf16.mxu0 0
        %1418 = vmatpush1.bf16.msra.mxu0 0
        %1419 = vmatprep.subr.bf16.mxu0 0
        %1420 = vmatpush1.bf16.msra.mxu0 0
        %1421 = vmatprep.subr.bf16.mxu0 0
        %1422 = vmatpush1.bf16.msra.mxu0 0
        %1423 = vmatprep.subr.bf16.mxu0 0
        %1424 = vmatpush1.bf16.msra.mxu0 0
        %1425 = vmatprep.mubr.bf16.mxu0 0
        %1426 = vmatmul.mubr.bf16.gmra.mrb[0].mxu0 %v1252
        %v1427 = vpop.f32.mrb[0].mxu0
        %v1428 = vadd.f32 %v1328, %v1427
        %v1429 = vpop.f32.mrb[0].mxu0
        %v1430 = vpop.f32.mrb[0].mxu0
        %v1431 = vpop.f32.mrb[0].mxu0
        %1432 = vdwg.mxu0
        %v1449 = vunpack.c.l.b16 %v1269
        %v1450 = vunpack.c.l.b16 %v1270
        %v1451 = vunpack.c.l.b16 %v1271
        %v1452 = vunpack.c.l.b16 %v1272
        %v1453 = vunpack.c.l.b16 %v1273
        %v1454 = vunpack.c.l.b16 %v1274
        %v1455 = vunpack.c.l.b16 %v1275
        %v1456 = vunpack.c.l.b16 %v1276
        %v1457 = vunpack.c.l.b16 %v1277
        %v1458 = vunpack.c.l.b16 %v1278
        %v1459 = vunpack.c.l.b16 %v1279
        %v1460 = vunpack.c.l.b16 %v1280
        %v1461 = vunpack.c.l.b16 %v1281
        %v1462 = vunpack.c.l.b16 %v1282
        %v1463 = vunpack.c.l.b16 %v1283
        %v1464 = vunpack.c.l.b16 %v1284
        %v1465 = vpack.c.b16 %v1450, %v1449
        %v1466 = vpack.c.b16 %v1452, %v1451
        %v1467 = vpack.c.b16 %v1454, %v1453
        %v1468 = vpack.c.b16 %v1456, %v1455
        %v1469 = vpack.c.b16 %v1458, %v1457
        %v1470 = vpack.c.b16 %v1460, %v1459
        %v1471 = vpack.c.b16 %v1462, %v1461
        %v1472 = vpack.c.b16 %v1464, %v1463
        %1481 = vmatprep.subr.bf16.mxu0 0
        %1482 = vmatpush1.bf16.msra.mxu0 %v1465
        %1483 = vmatprep.subr.bf16.mxu0 0
        %1484 = vmatpush1.bf16.msra.mxu0 %v1466
        %1485 = vmatprep.subr.bf16.mxu0 0
        %1486 = vmatpush1.bf16.msra.mxu0 %v1467
        %1487 = vmatprep.subr.bf16.mxu0 0
        %1488 = vmatpush1.bf16.msra.mxu0 %v1468
        %1489 = vmatprep.subr.bf16.mxu0 0
        %1490 = vmatpush1.bf16.msra.mxu0 %v1469
        %1491 = vmatprep.subr.bf16.mxu0 0
        %1492 = vmatpush1.bf16.msra.mxu0 %v1470
        %1493 = vmatprep.subr.bf16.mxu0 0
        %1494 = vmatpush1.bf16.msra.mxu0 %v1471
        %1495 = vmatprep.subr.bf16.mxu0 0
        %1496 = vmatpush1.bf16.msra.mxu0 %v1472
        %1497 = vmatprep.subr.bf16.mxu0 0
        %1498 = vmatpush1.bf16.msra.mxu0 0
        %1499 = vmatprep.subr.bf16.mxu0 0
        %1500 = vmatpush1.bf16.msra.mxu0 0
        %1501 = vmatprep.subr.bf16.mxu0 0
        %1502 = vmatpush1.bf16.msra.mxu0 0
        %1503 = vmatprep.subr.bf16.mxu0 0
        %1504 = vmatpush1.bf16.msra.mxu0 0
        %1505 = vmatprep.subr.bf16.mxu0 0
        %1506 = vmatpush1.bf16.msra.mxu0 0
        %1507 = vmatprep.subr.bf16.mxu0 0
        %1508 = vmatpush1.bf16.msra.mxu0 0
        %1509 = vmatprep.subr.bf16.mxu0 0
        %1510 = vmatpush1.bf16.msra.mxu0 0
        %1511 = vmatprep.subr.bf16.mxu0 0
        %1512 = vmatpush1.bf16.msra.mxu0 0
        %1513 = vmatprep.mubr.bf16.mxu0 0
        %1514 = vmatmul.mubr.bf16.gmra.mrb[0].mxu0 %v1252
        %v1515 = vpop.f32.mrb[0].mxu0
        %v1516 = vadd.f32 %v1332, %v1515
        %v1517 = vpop.f32.mrb[0].mxu0
        %v1518 = vpop.f32.mrb[0].mxu0
        %v1519 = vpop.f32.mrb[0].mxu0
        %1520 = vdwg.mxu0
        %v1537 = vunpack.c.l.b16 %v1285
        %v1538 = vunpack.c.l.b16 %v1286
        %v1539 = vunpack.c.l.b16 %v1287
        %v1540 = vunpack.c.l.b16 %v1288
        %v1541 = vunpack.c.l.b16 %v1289
        %v1542 = vunpack.c.l.b16 %v1290
        %v1543 = vunpack.c.l.b16 %v1291
        %v1544 = vunpack.c.l.b16 %v1292
        %v1545 = vunpack.c.l.b16 %v1293
        %v1546 = vunpack.c.l.b16 %v1294
        %v1547 = vunpack.c.l.b16 %v1295
        %v1548 = vunpack.c.l.b16 %v1296
        %v1549 = vunpack.c.l.b16 %v1297
        %v1550 = vunpack.c.l.b16 %v1298
        %v1551 = vunpack.c.l.b16 %v1299
        %v1552 = vunpack.c.l.b16 %v1300
        %v1553 = vpack.c.b16 %v1538, %v1537
        %v1554 = vpack.c.b16 %v1540, %v1539
        %v1555 = vpack.c.b16 %v1542, %v1541
        %v1556 = vpack.c.b16 %v1544, %v1543
        %v1557 = vpack.c.b16 %v1546, %v1545
        %v1558 = vpack.c.b16 %v1548, %v1547
        %v1559 = vpack.c.b16 %v1550, %v1549
        %v1560 = vpack.c.b16 %v1552, %v1551
        %1569 = vmatprep.subr.bf16.mxu0 0
        %1570 = vmatpush1.bf16.msra.mxu0 %v1553
        %1571 = vmatprep.subr.bf16.mxu0 0
        %1572 = vmatpush1.bf16.msra.mxu0 %v1554
        %1573 = vmatprep.subr.bf16.mxu0 0
        %1574 = vmatpush1.bf16.msra.mxu0 %v1555
        %1575 = vmatprep.subr.bf16.mxu0 0
        %1576 = vmatpush1.bf16.msra.mxu0 %v1556
        %1577 = vmatprep.subr.bf16.mxu0 0
        %1578 = vmatpush1.bf16.msra.mxu0 %v1557
        %1579 = vmatprep.subr.bf16.mxu0 0
        %1580 = vmatpush1.bf16.msra.mxu0 %v1558
        %1581 = vmatprep.subr.bf16.mxu0 0
        %1582 = vmatpush1.bf16.msra.mxu0 %v1559
        %1583 = vmatprep.subr.bf16.mxu0 0
        %1584 = vmatpush1.bf16.msra.mxu0 %v1560
        %1585 = vmatprep.subr.bf16.mxu0 0
        %1586 = vmatpush1.bf16.msra.mxu0 0
        %1587 = vmatprep.subr.bf16.mxu0 0
        %1588 = vmatpush1.bf16.msra.mxu0 0
        %1589 = vmatprep.subr.bf16.mxu0 0
        %1590 = vmatpush1.bf16.msra.mxu0 0
        %1591 = vmatprep.subr.bf16.mxu0 0
        %1592 = vmatpush1.bf16.msra.mxu0 0
        %1593 = vmatprep.subr.bf16.mxu0 0
        %1594 = vmatpush1.bf16.msra.mxu0 0
        %1595 = vmatprep.subr.bf16.mxu0 0
        %1596 = vmatpush1.bf16.msra.mxu0 0
        %1597 = vmatprep.subr.bf16.mxu0 0
        %1598 = vmatpush1.bf16.msra.mxu0 0
        %1599 = vmatprep.subr.bf16.mxu0 0
        %1600 = vmatpush1.bf16.msra.mxu0 0
        %1601 = vmatprep.mubr.bf16.mxu0 0
        %1602 = vmatmul.mubr.bf16.gmra.mrb[0].mxu0 %v1252
        %v1603 = vpop.f32.mrb[0].mxu0
        %v1604 = vadd.f32 %v1336, %v1603
        %v1605 = vpop.f32.mrb[0].mxu0
        %v1606 = vpop.f32.mrb[0].mxu0
        %v1607 = vpop.f32.mrb[0].mxu0
        %1608 = vdwg.mxu0
        %v1625 = vunpack.c.l.b16 %v1301
        %v1626 = vunpack.c.l.b16 %v1302
        %v1627 = vunpack.c.l.b16 %v1303
        %v1628 = vunpack.c.l.b16 %v1304
        %v1629 = vunpack.c.l.b16 %v1305
        %v1630 = vunpack.c.l.b16 %v1306
        %v1631 = vunpack.c.l.b16 %v1307
        %v1632 = vunpack.c.l.b16 %v1308
        %v1633 = vunpack.c.l.b16 %v1309
        %v1634 = vunpack.c.l.b16 %v1310
        %v1635 = vunpack.c.l.b16 %v1311
        %v1636 = vunpack.c.l.b16 %v1312
        %v1637 = vunpack.c.l.b16 %v1313
        %v1638 = vunpack.c.l.b16 %v1314
        %v1639 = vunpack.c.l.b16 %v1315
        %v1640 = vunpack.c.l.b16 %v1316
        %v1641 = vpack.c.b16 %v1626, %v1625
        %v1642 = vpack.c.b16 %v1628, %v1627
        %v1643 = vpack.c.b16 %v1630, %v1629
        %v1644 = vpack.c.b16 %v1632, %v1631
        %v1645 = vpack.c.b16 %v1634, %v1633
        %v1646 = vpack.c.b16 %v1636, %v1635
        %v1647 = vpack.c.b16 %v1638, %v1637
        %v1648 = vpack.c.b16 %v1640, %v1639
        %1657 = vmatprep.subr.bf16.mxu0 0
        %1658 = vmatpush1.bf16.msra.mxu0 %v1641
        %1659 = vmatprep.subr.bf16.mxu0 0
        %1660 = vmatpush1.bf16.msra.mxu0 %v1642
        %1661 = vmatprep.subr.bf16.mxu0 0
        %1662 = vmatpush1.bf16.msra.mxu0 %v1643
        %1663 = vmatprep.subr.bf16.mxu0 0
        %1664 = vmatpush1.bf16.msra.mxu0 %v1644
        %1665 = vmatprep.subr.bf16.mxu0 0
        %1666 = vmatpush1.bf16.msra.mxu0 %v1645
        %1667 = vmatprep.subr.bf16.mxu0 0
        %1668 = vmatpush1.bf16.msra.mxu0 %v1646
        %1669 = vmatprep.subr.bf16.mxu0 0
        %1670 = vmatpush1.bf16.msra.mxu0 %v1647
        %1671 = vmatprep.subr.bf16.mxu0 0
        %1672 = vmatpush1.bf16.msra.mxu0 %v1648
        %1673 = vmatprep.subr.bf16.mxu0 0
        %1674 = vmatpush1.bf16.msra.mxu0 0
        %1675 = vmatprep.subr.bf16.mxu0 0
        %1676 = vmatpush1.bf16.msra.mxu0 0
        %1677 = vmatprep.subr.bf16.mxu0 0
        %1678 = vmatpush1.bf16.msra.mxu0 0
        %1679 = vmatprep.subr.bf16.mxu0 0
        %1680 = vmatpush1.bf16.msra.mxu0 0
        %1681 = vmatprep.subr.bf16.mxu0 0
        %1682 = vmatpush1.bf16.msra.mxu0 0
        %1683 = vmatprep.subr.bf16.mxu0 0
        %1684 = vmatpush1.bf16.msra.mxu0 0
        %1685 = vmatprep.subr.bf16.mxu0 0
        %1686 = vmatpush1.bf16.msra.mxu0 0
        %1687 = vmatprep.subr.bf16.mxu0 0
        %1688 = vmatpush1.bf16.msra.mxu0 0
        %1689 = vmatprep.mubr.bf16.mxu0 0
        %1690 = vmatmul.mubr.bf16.gmra.mrb[0].mxu0 %v1252
        %v1691 = vpop.f32.mrb[0].mxu0
        %v1692 = vadd.f32 %v1340, %v1691
        %v1693 = vpop.f32.mrb[0].mxu0
        %v1694 = vpop.f32.mrb[0].mxu0
        %v1695 = vpop.f32.mrb[0].mxu0
        %1696 = vdwg.mxu0
        %v1697 = vmul.f32 %v1428, 0.17677669
        %v1698 = vmul.f32 %v1516, 0.17677669
        %v1699 = vmul.f32 %v1604, 0.17677669
        %v1700 = vmul.f32 %v1692, 0.17677669
        %v1701 = vpack.c.bf16 %v1697, %v1697
        %v1702 = vpack.c.bf16 %v1698, %v1698
        %v1703 = vpack.c.bf16 %v1699, %v1699
        %v1704 = vpack.c.bf16 %v1700, %v1700
        %v1705 = vld [vmem:[#allocation2] sm:$0xf]
        %v1706 = vld [vmem:[#allocation2 + $0x4] sm:$0xf]
        %v1707 = vld [vmem:[#allocation2 + $0x8] sm:$0xf]
        %v1708 = vld [vmem:[#allocation2 + $0xc] sm:$0xf]
        %v1709 = vld [vmem:[#allocation3] sm:$0xf]
        %v1710 = vld [vmem:[#allocation3 + $0x4] sm:$0xf]
        %v1711 = vld [vmem:[#allocation3 + $0x8] sm:$0xf]
        %v1712 = vld [vmem:[#allocation3 + $0xc] sm:$0xf]
        %vm1713 = vcmask 261120
        %v1715 = vsel %vm1713, %v1701, 0
        %v1718 = vsel %vm1713, %v1705, 0
        %1720 = vmatprep.subr.bf16.mxu0 0
        %1721 = vmatpush1.bf16.xpose.msra.mxu0 %v1718
        %1722 = vmatprep.subr.bf16.mxu0 0
        %1723 = vmatpush1.bf16.xpose.msra.mxu0 0
        %1724 = vmatprep.subr.bf16.mxu0 0
        %1725 = vmatpush1.bf16.xpose.msra.mxu0 0
        %1726 = vmatprep.subr.bf16.mxu0 0
        %1727 = vmatpush1.bf16.xpose.msra.mxu0 0
        %1728 = vmatprep.subr.bf16.mxu0 0
        %1729 = vmatpush1.bf16.xpose.msra.mxu0 0
        %1730 = vmatprep.subr.bf16.mxu0 0
        %1731 = vmatpush1.bf16.xpose.msra.mxu0 0
        %1732 = vmatprep.subr.bf16.mxu0 0
        %1733 = vmatpush1.bf16.xpose.msra.mxu0 0
        %1734 = vmatprep.subr.bf16.mxu0 0
        %1735 = vmatpush1.bf16.xpose.msra.mxu0 0
        %1736 = vmatprep.subr.bf16.mxu0 0
        %1737 = vmatpush1.bf16.xpose.msra.mxu0 0
        %1738 = vmatprep.subr.bf16.mxu0 0
        %1739 = vmatpush1.bf16.xpose.msra.mxu0 0
        %1740 = vmatprep.subr.bf16.mxu0 0
        %1741 = vmatpush1.bf16.xpose.msra.mxu0 0
        %1742 = vmatprep.subr.bf16.mxu0 0
        %1743 = vmatpush1.bf16.xpose.msra.mxu0 0
        %1744 = vmatprep.subr.bf16.mxu0 0
        %1745 = vmatpush1.bf16.xpose.msra.mxu0 0
        %1746 = vmatprep.subr.bf16.mxu0 0
        %1747 = vmatpush1.bf16.xpose.msra.mxu0 0
        %1748 = vmatprep.subr.bf16.mxu0 0
        %1749 = vmatpush1.bf16.xpose.msra.mxu0 0
        %1750 = vmatprep.subr.bf16.mxu0 0
        %1751 = vmatpush1.bf16.xpose.msra.mxu0 0
        %1752 = vmatprep.mubr.bf16.mxu0 0
        %1753 = vmatmul.mubr.bf16.gmra.mrb[0].mxu0 %v1715
        %v1754 = vpop.f32.mrb[0].mxu0
        %v1755 = vadd.f32 0.0, %v1754
        %v1756 = vpop.f32.mrb[0].mxu0
        %v1757 = vpop.f32.mrb[0].mxu0
        %v1758 = vpop.f32.mrb[0].mxu0
        %1759 = vdwg.mxu0
        %v1761 = vsel %vm1713, %v1702, 0
        %v1764 = vsel %vm1713, %v1706, 0
        %1766 = vmatprep.subr.bf16.mxu0 0
        %1767 = vmatpush1.bf16.xpose.msra.mxu0 %v1764
        %1768 = vmatprep.subr.bf16.mxu0 0
        %1769 = vmatpush1.bf16.xpose.msra.mxu0 0
        %1770 = vmatprep.subr.bf16.mxu0 0
        %1771 = vmatpush1.bf16.xpose.msra.mxu0 0
        %1772 = vmatprep.subr.bf16.mxu0 0
        %1773 = vmatpush1.bf16.xpose.msra.mxu0 0
        %1774 = vmatprep.subr.bf16.mxu0 0
        %1775 = vmatpush1.bf16.xpose.msra.mxu0 0
        %1776 = vmatprep.subr.bf16.mxu0 0
        %1777 = vmatpush1.bf16.xpose.msra.mxu0 0
        %1778 = vmatprep.subr.bf16.mxu0 0
        %1779 = vmatpush1.bf16.xpose.msra.mxu0 0
        %1780 = vmatprep.subr.bf16.mxu0 0
        %1781 = vmatpush1.bf16.xpose.msra.mxu0 0
        %1782 = vmatprep.subr.bf16.mxu0 0
        %1783 = vmatpush1.bf16.xpose.msra.mxu0 0
        %1784 = vmatprep.subr.bf16.mxu0 0
        %1785 = vmatpush1.bf16.xpose.msra.mxu0 0
        %1786 = vmatprep.subr.bf16.mxu0 0
        %1787 = vmatpush1.bf16.xpose.msra.mxu0 0
        %1788 = vmatprep.subr.bf16.mxu0 0
        %1789 = vmatpush1.bf16.xpose.msra.mxu0 0
        %1790 = vmatprep.subr.bf16.mxu0 0
        %1791 = vmatpush1.bf16.xpose.msra.mxu0 0
        %1792 = vmatprep.subr.bf16.mxu0 0
        %1793 = vmatpush1.bf16.xpose.msra.mxu0 0
        %1794 = vmatprep.subr.bf16.mxu0 0
        %1795 = vmatpush1.bf16.xpose.msra.mxu0 0
        %1796 = vmatprep.subr.bf16.mxu0 0
        %1797 = vmatpush1.bf16.xpose.msra.mxu0 0
        %1798 = vmatprep.mubr.bf16.mxu0 0
        %1799 = vmatmul.mubr.bf16.gmra.mrb[0].mxu0 %v1761
        %v1800 = vpop.f32.mrb[0].mxu0
        %v1801 = vadd.f32 0.0, %v1800
        %v1802 = vpop.f32.mrb[0].mxu0
        %v1803 = vpop.f32.mrb[0].mxu0
        %v1804 = vpop.f32.mrb[0].mxu0
        %1805 = vdwg.mxu0
        %v1807 = vsel %vm1713, %v1703, 0
        %v1810 = vsel %vm1713, %v1707, 0
        %1812 = vmatprep.subr.bf16.mxu0 0
        %1813 = vmatpush1.bf16.xpose.msra.mxu0 %v1810
        %1814 = vmatprep.subr.bf16.mxu0 0
        %1815 = vmatpush1.bf16.xpose.msra.mxu0 0
        %1816 = vmatprep.subr.bf16.mxu0 0
        %1817 = vmatpush1.bf16.xpose.msra.mxu0 0
        %1818 = vmatprep.subr.bf16.mxu0 0
        %1819 = vmatpush1.bf16.xpose.msra.mxu0 0
        %1820 = vmatprep.subr.bf16.mxu0 0
        %1821 = vmatpush1.bf16.xpose.msra.mxu0 0
        %1822 = vmatprep.subr.bf16.mxu0 0
        %1823 = vmatpush1.bf16.xpose.msra.mxu0 0
        %1824 = vmatprep.subr.bf16.mxu0 0
        %1825 = vmatpush1.bf16.xpose.msra.mxu0 0
        %1826 = vmatprep.subr.bf16.mxu0 0
        %1827 = vmatpush1.bf16.xpose.msra.mxu0 0
        %1828 = vmatprep.subr.bf16.mxu0 0
        %1829 = vmatpush1.bf16.xpose.msra.mxu0 0
        %1830 = vmatprep.subr.bf16.mxu0 0
        %1831 = vmatpush1.bf16.xpose.msra.mxu0 0
        %1832 = vmatprep.subr.bf16.mxu0 0
        %1833 = vmatpush1.bf16.xpose.msra.mxu0 0
        %1834 = vmatprep.subr.bf16.mxu0 0
        %1835 = vmatpush1.bf16.xpose.msra.mxu0 0
        %1836 = vmatprep.subr.bf16.mxu0 0
        %1837 = vmatpush1.bf16.xpose.msra.mxu0 0
        %1838 = vmatprep.subr.bf16.mxu0 0
        %1839 = vmatpush1.bf16.xpose.msra.mxu0 0
        %1840 = vmatprep.subr.bf16.mxu0 0
        %1841 = vmatpush1.bf16.xpose.msra.mxu0 0
        %1842 = vmatprep.subr.bf16.mxu0 0
        %1843 = vmatpush1.bf16.xpose.msra.mxu0 0
        %1844 = vmatprep.mubr.bf16.mxu0 0
        %1845 = vmatmul.mubr.bf16.gmra.mrb[0].mxu0 %v1807
        %v1846 = vpop.f32.mrb[0].mxu0
        %v1847 = vadd.f32 0.0, %v1846
        %v1848 = vpop.f32.mrb[0].mxu0
        %v1849 = vpop.f32.mrb[0].mxu0
        %v1850 = vpop.f32.mrb[0].mxu0
        %1851 = vdwg.mxu0
        %v1853 = vsel %vm1713, %v1704, 0
        %v1856 = vsel %vm1713, %v1708, 0
        %1858 = vmatprep.subr.bf16.mxu0 0
        %1859 = vmatpush1.bf16.xpose.msra.mxu0 %v1856
        %1860 = vmatprep.subr.bf16.mxu0 0
        %1861 = vmatpush1.bf16.xpose.msra.mxu0 0
        %1862 = vmatprep.subr.bf16.mxu0 0
        %1863 = vmatpush1.bf16.xpose.msra.mxu0 0
        %1864 = vmatprep.subr.bf16.mxu0 0
        %1865 = vmatpush1.bf16.xpose.msra.mxu0 0
        %1866 = vmatprep.subr.bf16.mxu0 0
        %1867 = vmatpush1.bf16.xpose.msra.mxu0 0
        %1868 = vmatprep.subr.bf16.mxu0 0
        %1869 = vmatpush1.bf16.xpose.msra.mxu0 0
        %1870 = vmatprep.subr.bf16.mxu0 0
        %1871 = vmatpush1.bf16.xpose.msra.mxu0 0
        %1872 = vmatprep.subr.bf16.mxu0 0
        %1873 = vmatpush1.bf16.xpose.msra.mxu0 0
        %1874 = vmatprep.subr.bf16.mxu0 0
        %1875 = vmatpush1.bf16.xpose.msra.mxu0 0
        %1876 = vmatprep.subr.bf16.mxu0 0
        %1877 = vmatpush1.bf16.xpose.msra.mxu0 0
        %1878 = vmatprep.subr.bf16.mxu0 0
        %1879 = vmatpush1.bf16.xpose.msra.mxu0 0
        %1880 = vmatprep.subr.bf16.mxu0 0
        %1881 = vmatpush1.bf16.xpose.msra.mxu0 0
        %1882 = vmatprep.subr.bf16.mxu0 0
        %1883 = vmatpush1.bf16.xpose.msra.mxu0 0
        %1884 = vmatprep.subr.bf16.mxu0 0
        %1885 = vmatpush1.bf16.xpose.msra.mxu0 0
        %1886 = vmatprep.subr.bf16.mxu0 0
        %1887 = vmatpush1.bf16.xpose.msra.mxu0 0
        %1888 = vmatprep.subr.bf16.mxu0 0
        %1889 = vmatpush1.bf16.xpose.msra.mxu0 0
        %1890 = vmatprep.mubr.bf16.mxu0 0
        %1891 = vmatmul.mubr.bf16.gmra.mrb[0].mxu0 %v1853
        %v1892 = vpop.f32.mrb[0].mxu0
        %v1893 = vadd.f32 0.0, %v1892
        %v1894 = vpop.f32.mrb[0].mxu0
        %v1895 = vpop.f32.mrb[0].mxu0
        %v1896 = vpop.f32.mrb[0].mxu0
        %1897 = vdwg.mxu0
        %vm1898 = vcmask 64512
        %v1899 = vsel %vm1898, %v1755, -inf
        %1900 = vmax.xlane.f32.xlu0 %v1899
        %v1901 = vpop.xlane.xlu0 %1900
        %v1902 = vsel %vm1898, %v1801, -inf
        %1903 = vmax.xlane.f32.xlu0 %v1902
        %v1904 = vpop.xlane.xlu0 %1903
        %v1905 = vsel %vm1898, %v1847, -inf
        %1906 = vmax.xlane.f32.xlu0 %v1905
        %v1907 = vpop.xlane.xlu0 %1906
        %v1908 = vsel %vm1898, %v1893, -inf
        %1909 = vmax.xlane.f32.xlu0 %v1908
        %v1910 = vpop.xlane.xlu0 %1909
        %v1911 = vsub.f32 %v1755, %v1901
        %v1912 = vsub.f32 %v1801, %v1904
        %v1913 = vsub.f32 %v1847, %v1907
        %v1914 = vsub.f32 %v1893, %v1910
        %v1915 = vmul.f32 %v1911, 1.442695
        %v1916 = vpow.pop %v1915
        %v1917 = vmul.f32 %v1912, 1.442695
        %v1918 = vpow.pop %v1917
        %v1919 = vmul.f32 %v1913, 1.442695
        %v1920 = vpow.pop %v1919
        %v1921 = vmul.f32 %v1914, 1.442695
        %v1922 = vpow.pop %v1921
        %v1923 = vsel %vm1898, %v1916, 0.0
        %1924 = vadd.xlane.f32.xlu0 %v1923
        %v1925 = vpop.xlane.xlu0 %1924
        %v1926 = vsel %vm1898, %v1918, 0.0
        %1927 = vadd.xlane.f32.xlu0 %v1926
        %v1928 = vpop.xlane.xlu0 %1927
        %v1929 = vsel %vm1898, %v1920, 0.0
        %1930 = vadd.xlane.f32.xlu0 %v1929
        %v1931 = vpop.xlane.xlu0 %1930
        %v1932 = vsel %vm1898, %v1922, 0.0
        %1933 = vadd.xlane.f32.xlu0 %v1932
        %v1934 = vpop.xlane.xlu0 %1933
        %v1935 = vrcp.pop %v1925
        %v1936 = vrcp.pop %v1928
        %v1937 = vrcp.pop %v1931
        %v1938 = vrcp.pop %v1934
        %v1939 = vmul.f32 %v1916, %v1935
        %v1940 = vmul.f32 %v1918, %v1936
        %v1941 = vmul.f32 %v1920, %v1937
        %v1942 = vmul.f32 %v1922, %v1938
        %v1943 = vpack.c.bf16 %v1939, %v1939
        %v1944 = vpack.c.bf16 %v1940, %v1940
        %v1945 = vpack.c.bf16 %v1941, %v1941
        %v1946 = vpack.c.bf16 %v1942, %v1942
        %v1948 = vsel %vm1898, %v1943, 0
        %vm1950 = vcmask 1043456
        %v1952 = vsel %vm1950, %v1709, 0
        %1954 = vmatprep.subr.bf16.mxu0 0
        %1955 = vmatpush1.bf16.msra.mxu0 %v1952
        %1956 = vmatprep.subr.bf16.mxu0 0
        %1957 = vmatpush1.bf16.msra.mxu0 0
        %1958 = vmatprep.subr.bf16.mxu0 0
        %1959 = vmatpush1.bf16.msra.mxu0 0
        %1960 = vmatprep.subr.bf16.mxu0 0
        %1961 = vmatpush1.bf16.msra.mxu0 0
        %1962 = vmatprep.subr.bf16.mxu0 0
        %1963 = vmatpush1.bf16.msra.mxu0 0
        %1964 = vmatprep.subr.bf16.mxu0 0
        %1965 = vmatpush1.bf16.msra.mxu0 0
        %1966 = vmatprep.subr.bf16.mxu0 0
        %1967 = vmatpush1.bf16.msra.mxu0 0
        %1968 = vmatprep.subr.bf16.mxu0 0
        %1969 = vmatpush1.bf16.msra.mxu0 0
        %1970 = vmatprep.subr.bf16.mxu0 0
        %1971 = vmatpush1.bf16.msra.mxu0 0
        %1972 = vmatprep.subr.bf16.mxu0 0
        %1973 = vmatpush1.bf16.msra.mxu0 0
        %1974 = vmatprep.subr.bf16.mxu0 0
        %1975 = vmatpush1.bf16.msra.mxu0 0
        %1976 = vmatprep.subr.bf16.mxu0 0
        %1977 = vmatpush1.bf16.msra.mxu0 0
        %1978 = vmatprep.subr.bf16.mxu0 0
        %1979 = vmatpush1.bf16.msra.mxu0 0
        %1980 = vmatprep.subr.bf16.mxu0 0
        %1981 = vmatpush1.bf16.msra.mxu0 0
        %1982 = vmatprep.subr.bf16.mxu0 0
        %1983 = vmatpush1.bf16.msra.mxu0 0
        %1984 = vmatprep.subr.bf16.mxu0 0
        %1985 = vmatpush1.bf16.msra.mxu0 0
        %1986 = vmatprep.mubr.bf16.mxu0 0
        %1987 = vmatmul.mubr.bf16.gmra.mrb[0].mxu0 %v1948
        %v1988 = vpop.f32.mrb[0].mxu0
        %v1989 = vadd.f32 0.0, %v1988
        %v1990 = vpop.f32.mrb[0].mxu0
        %v1991 = vpop.f32.mrb[0].mxu0
        %v1992 = vpop.f32.mrb[0].mxu0
        %1993 = vdwg.mxu0
        %v1995 = vsel %vm1898, %v1944, 0
        %v1998 = vsel %vm1950, %v1710, 0
        %2000 = vmatprep.subr.bf16.mxu0 0
        %2001 = vmatpush1.bf16.msra.mxu0 %v1998
        %2002 = vmatprep.subr.bf16.mxu0 0
        %2003 = vmatpush1.bf16.msra.mxu0 0
        %2004 = vmatprep.subr.bf16.mxu0 0
        %2005 = vmatpush1.bf16.msra.mxu0 0
        %2006 = vmatprep.subr.bf16.mxu0 0
        %2007 = vmatpush1.bf16.msra.mxu0 0
        %2008 = vmatprep.subr.bf16.mxu0 0
        %2009 = vmatpush1.bf16.msra.mxu0 0
        %2010 = vmatprep.subr.bf16.mxu0 0
        %2011 = vmatpush1.bf16.msra.mxu0 0
        %2012 = vmatprep.subr.bf16.mxu0 0
        %2013 = vmatpush1.bf16.msra.mxu0 0
        %2014 = vmatprep.subr.bf16.mxu0 0
        %2015 = vmatpush1.bf16.msra.mxu0 0
        %2016 = vmatprep.subr.bf16.mxu0 0
        %2017 = vmatpush1.bf16.msra.mxu0 0
        %2018 = vmatprep.subr.bf16.mxu0 0
        %2019 = vmatpush1.bf16.msra.mxu0 0
        %2020 = vmatprep.subr.bf16.mxu0 0
        %2021 = vmatpush1.bf16.msra.mxu0 0
        %2022 = vmatprep.subr.bf16.mxu0 0
        %2023 = vmatpush1.bf16.msra.mxu0 0
        %2024 = vmatprep.subr.bf16.mxu0 0
        %2025 = vmatpush1.bf16.msra.mxu0 0
        %2026 = vmatprep.subr.bf16.mxu0 0
        %2027 = vmatpush1.bf16.msra.mxu0 0
        %2028 = vmatprep.subr.bf16.mxu0 0
        %2029 = vmatpush1.bf16.msra.mxu0 0
        %2030 = vmatprep.subr.bf16.mxu0 0
        %2031 = vmatpush1.bf16.msra.mxu0 0
        %2032 = vmatprep.mubr.bf16.mxu0 0
        %2033 = vmatmul.mubr.bf16.gmra.mrb[0].mxu0 %v1995
        %v2034 = vpop.f32.mrb[0].mxu0
        %v2035 = vadd.f32 0.0, %v2034
        %v2036 = vpop.f32.mrb[0].mxu0
        %v2037 = vpop.f32.mrb[0].mxu0
        %v2038 = vpop.f32.mrb[0].mxu0
        %2039 = vdwg.mxu0
        %v2041 = vsel %vm1898, %v1945, 0
        %v2044 = vsel %vm1950, %v1711, 0
        %2046 = vmatprep.subr.bf16.mxu0 0
        %2047 = vmatpush1.bf16.msra.mxu0 %v2044
        %2048 = vmatprep.subr.bf16.mxu0 0
        %2049 = vmatpush1.bf16.msra.mxu0 0
        %2050 = vmatprep.subr.bf16.mxu0 0
        %2051 = vmatpush1.bf16.msra.mxu0 0
        %2052 = vmatprep.subr.bf16.mxu0 0
        %2053 = vmatpush1.bf16.msra.mxu0 0
        %2054 = vmatprep.subr.bf16.mxu0 0
        %2055 = vmatpush1.bf16.msra.mxu0 0
        %2056 = vmatprep.subr.bf16.mxu0 0
        %2057 = vmatpush1.bf16.msra.mxu0 0
        %2058 = vmatprep.subr.bf16.mxu0 0
        %2059 = vmatpush1.bf16.msra.mxu0 0
        %2060 = vmatprep.subr.bf16.mxu0 0
        %2061 = vmatpush1.bf16.msra.mxu0 0
        %2062 = vmatprep.subr.bf16.mxu0 0
        %2063 = vmatpush1.bf16.msra.mxu0 0
        %2064 = vmatprep.subr.bf16.mxu0 0
        %2065 = vmatpush1.bf16.msra.mxu0 0
        %2066 = vmatprep.subr.bf16.mxu0 0
        %2067 = vmatpush1.bf16.msra.mxu0 0
        %2068 = vmatprep.subr.bf16.mxu0 0
        %2069 = vmatpush1.bf16.msra.mxu0 0
        %2070 = vmatprep.subr.bf16.mxu0 0
        %2071 = vmatpush1.bf16.msra.mxu0 0
        %2072 = vmatprep.subr.bf16.mxu0 0
        %2073 = vmatpush1.bf16.msra.mxu0 0
        %2074 = vmatprep.subr.bf16.mxu0 0
        %2075 = vmatpush1.bf16.msra.mxu0 0
        %2076 = vmatprep.subr.bf16.mxu0 0
        %2077 = vmatpush1.bf16.msra.mxu0 0
        %2078 = vmatprep.mubr.bf16.mxu0 0
        %2079 = vmatmul.mubr.bf16.gmra.mrb[0].mxu0 %v2041
        %v2080 = vpop.f32.mrb[0].mxu0
        %v2081 = vadd.f32 0.0, %v2080
        %v2082 = vpop.f32.mrb[0].mxu0
        %v2083 = vpop.f32.mrb[0].mxu0
        %v2084 = vpop.f32.mrb[0].mxu0
        %2085 = vdwg.mxu0
        %v2087 = vsel %vm1898, %v1946, 0
        %v2090 = vsel %vm1950, %v1712, 0
        %2092 = vmatprep.subr.bf16.mxu0 0
        %2093 = vmatpush1.bf16.msra.mxu0 %v2090
        %2094 = vmatprep.subr.bf16.mxu0 0
        %2095 = vmatpush1.bf16.msra.mxu0 0
        %2096 = vmatprep.subr.bf16.mxu0 0
        %2097 = vmatpush1.bf16.msra.mxu0 0
        %2098 = vmatprep.subr.bf16.mxu0 0
        %2099 = vmatpush1.bf16.msra.mxu0 0
        %2100 = vmatprep.subr.bf16.mxu0 0
        %2101 = vmatpush1.bf16.msra.mxu0 0
        %2102 = vmatprep.subr.bf16.mxu0 0
        %2103 = vmatpush1.bf16.msra.mxu0 0
        %2104 = vmatprep.subr.bf16.mxu0 0
        %2105 = vmatpush1.bf16.msra.mxu0 0
        %2106 = vmatprep.subr.bf16.mxu0 0
        %2107 = vmatpush1.bf16.msra.mxu0 0
        %2108 = vmatprep.subr.bf16.mxu0 0
        %2109 = vmatpush1.bf16.msra.mxu0 0
        %2110 = vmatprep.subr.bf16.mxu0 0
        %2111 = vmatpush1.bf16.msra.mxu0 0
        %2112 = vmatprep.subr.bf16.mxu0 0
        %2113 = vmatpush1.bf16.msra.mxu0 0
        %2114 = vmatprep.subr.bf16.mxu0 0
        %2115 = vmatpush1.bf16.msra.mxu0 0
        %2116 = vmatprep.subr.bf16.mxu0 0
        %2117 = vmatpush1.bf16.msra.mxu0 0
        %2118 = vmatprep.subr.bf16.mxu0 0
        %2119 = vmatpush1.bf16.msra.mxu0 0
        %2120 = vmatprep.subr.bf16.mxu0 0
        %2121 = vmatpush1.bf16.msra.mxu0 0
        %2122 = vmatprep.subr.bf16.mxu0 0
        %2123 = vmatpush1.bf16.msra.mxu0 0
        %2124 = vmatprep.mubr.bf16.mxu0 0
        %2125 = vmatmul.mubr.bf16.gmra.mrb[0].mxu0 %v2087
        %v2126 = vpop.f32.mrb[0].mxu0
        %v2127 = vadd.f32 0.0, %v2126
        %v2128 = vpop.f32.mrb[0].mxu0
        %v2129 = vpop.f32.mrb[0].mxu0
        %v2130 = vpop.f32.mrb[0].mxu0
        %2131 = vdwg.mxu0
        %v2132 = vpack.c.bf16 %v1989, %v1989
        %v2133 = vpack.c.bf16 %v2035, %v2035
        %v2134 = vpack.c.bf16 %v2081, %v2081
        %v2135 = vpack.c.bf16 %v2127, %v2127
        %v2136 = vld [vmem:[%s5] sm:$0xf]
        %v2137 = vld [vmem:[%s5 + $0x4] sm:$0xf]
        %v2138 = vld [vmem:[%s5 + $0x8] sm:$0xf]
        %v2139 = vld [vmem:[%s5 + $0xc] sm:$0xf]
        %v2140 = vld [vmem:[%s5 + $0x10] sm:$0xf]
        %v2141 = vld [vmem:[%s5 + $0x14] sm:$0xf]
        %v2142 = vld [vmem:[%s5 + $0x18] sm:$0xf]
        %v2143 = vld [vmem:[%s5 + $0x1c] sm:$0xf]
        %v2144 = vld [vmem:[%s5 + $0x20] sm:$0xf]
        %v2145 = vld [vmem:[%s5 + $0x24] sm:$0xf]
        %v2146 = vld [vmem:[%s5 + $0x28] sm:$0xf]
        %v2147 = vld [vmem:[%s5 + $0x2c] sm:$0xf]
        %v2148 = vld [vmem:[%s5 + $0x30] sm:$0xf]
        %v2149 = vld [vmem:[%s5 + $0x34] sm:$0xf]
        %v2150 = vld [vmem:[%s5 + $0x38] sm:$0xf]
        %v2151 = vld [vmem:[%s5 + $0x3c] sm:$0xf]
        %v2156 = vunpack.c.l.b16 %v2136
        %v2157 = vunpack.c.l.b16 %v2137
        %v2158 = vunpack.c.l.b16 %v2138
        %v2159 = vunpack.c.l.b16 %v2139
        %v2160 = vpack.c.b16 %v2157, %v2156
        %v2161 = vpack.c.b16 %v2159, %v2158
        %v2165 = vsel %vm1713, %v2132, 0
        %2167 = vmatprep.subr.bf16.mxu0 0
        %2168 = vmatpush1.bf16.msra.mxu0 %v2160
        %2169 = vmatprep.subr.bf16.mxu0 0
        %2170 = vmatpush1.bf16.msra.mxu0 %v2161
        %2171 = vmatprep.subr.bf16.mxu0 0
        %2172 = vmatpush1.bf16.msra.mxu0 0
        %2173 = vmatprep.subr.bf16.mxu0 0
        %2174 = vmatpush1.bf16.msra.mxu0 0
        %2175 = vmatprep.subr.bf16.mxu0 0
        %2176 = vmatpush1.bf16.msra.mxu0 0
        %2177 = vmatprep.subr.bf16.mxu0 0
        %2178 = vmatpush1.bf16.msra.mxu0 0
        %2179 = vmatprep.subr.bf16.mxu0 0
        %2180 = vmatpush1.bf16.msra.mxu0 0
        %2181 = vmatprep.subr.bf16.mxu0 0
        %2182 = vmatpush1.bf16.msra.mxu0 0
        %2183 = vmatprep.subr.bf16.mxu0 0
        %2184 = vmatpush1.bf16.msra.mxu0 0
        %2185 = vmatprep.subr.bf16.mxu0 0
        %2186 = vmatpush1.bf16.msra.mxu0 0
        %2187 = vmatprep.subr.bf16.mxu0 0
        %2188 = vmatpush1.bf16.msra.mxu0 0
        %2189 = vmatprep.subr.bf16.mxu0 0
        %2190 = vmatpush1.bf16.msra.mxu0 0
        %2191 = vmatprep.subr.bf16.mxu0 0
        %2192 = vmatpush1.bf16.msra.mxu0 0
        %2193 = vmatprep.subr.bf16.mxu0 0
        %2194 = vmatpush1.bf16.msra.mxu0 0
        %2195 = vmatprep.subr.bf16.mxu0 0
        %2196 = vmatpush1.bf16.msra.mxu0 0
        %2197 = vmatprep.subr.bf16.mxu0 0
        %2198 = vmatpush1.bf16.msra.mxu0 0
        %2199 = vmatprep.mubr.bf16.mxu0 0
        %2200 = vmatmul.mubr.bf16.gmra.mrb[0].mxu0 %v2165
        %v2201 = vpop.f32.mrb[0].mxu0
        %v2202 = vadd.f32 0.0, %v2201
        %v2203 = vpop.f32.mrb[0].mxu0
        %v2204 = vpop.f32.mrb[0].mxu0
        %v2205 = vpop.f32.mrb[0].mxu0
        %2206 = vdwg.mxu0
        %v2211 = vunpack.c.l.b16 %v2140
        %v2212 = vunpack.c.l.b16 %v2141
        %v2213 = vunpack.c.l.b16 %v2142
        %v2214 = vunpack.c.l.b16 %v2143
        %v2215 = vpack.c.b16 %v2212, %v2211
        %v2216 = vpack.c.b16 %v2214, %v2213
        %v2220 = vsel %vm1713, %v2133, 0
        %2222 = vmatprep.subr.bf16.mxu0 0
        %2223 = vmatpush1.bf16.msra.mxu0 %v2215
        %2224 = vmatprep.subr.bf16.mxu0 0
        %2225 = vmatpush1.bf16.msra.mxu0 %v2216
        %2226 = vmatprep.subr.bf16.mxu0 0
        %2227 = vmatpush1.bf16.msra.mxu0 0
        %2228 = vmatprep.subr.bf16.mxu0 0
        %2229 = vmatpush1.bf16.msra.mxu0 0
        %2230 = vmatprep.subr.bf16.mxu0 0
        %2231 = vmatpush1.bf16.msra.mxu0 0
        %2232 = vmatprep.subr.bf16.mxu0 0
        %2233 = vmatpush1.bf16.msra.mxu0 0
        %2234 = vmatprep.subr.bf16.mxu0 0
        %2235 = vmatpush1.bf16.msra.mxu0 0
        %2236 = vmatprep.subr.bf16.mxu0 0
        %2237 = vmatpush1.bf16.msra.mxu0 0
        %2238 = vmatprep.subr.bf16.mxu0 0
        %2239 = vmatpush1.bf16.msra.mxu0 0
        %2240 = vmatprep.subr.bf16.mxu0 0
        %2241 = vmatpush1.bf16.msra.mxu0 0
        %2242 = vmatprep.subr.bf16.mxu0 0
        %2243 = vmatpush1.bf16.msra.mxu0 0
        %2244 = vmatprep.subr.bf16.mxu0 0
        %2245 = vmatpush1.bf16.msra.mxu0 0
        %2246 = vmatprep.subr.bf16.mxu0 0
        %2247 = vmatpush1.bf16.msra.mxu0 0
        %2248 = vmatprep.subr.bf16.mxu0 0
        %2249 = vmatpush1.bf16.msra.mxu0 0
        %2250 = vmatprep.subr.bf16.mxu0 0
        %2251 = vmatpush1.bf16.msra.mxu0 0
        %2252 = vmatprep.subr.bf16.mxu0 0
        %2253 = vmatpush1.bf16.msra.mxu0 0
        %2254 = vmatprep.mubr.bf16.mxu0 0
        %2255 = vmatmul.mubr.bf16.gmra.mrb[0].mxu0 %v2220
        %v2256 = vpop.f32.mrb[0].mxu0
        %v2257 = vadd.f32 0.0, %v2256
        %v2258 = vpop.f32.mrb[0].mxu0
        %v2259 = vpop.f32.mrb[0].mxu0
        %v2260 = vpop.f32.mrb[0].mxu0
        %2261 = vdwg.mxu0
        %v2266 = vunpack.c.l.b16 %v2144
        %v2267 = vunpack.c.l.b16 %v2145
        %v2268 = vunpack.c.l.b16 %v2146
        %v2269 = vunpack.c.l.b16 %v2147
        %v2270 = vpack.c.b16 %v2267, %v2266
        %v2271 = vpack.c.b16 %v2269, %v2268
        %v2275 = vsel %vm1713, %v2134, 0
        %2277 = vmatprep.subr.bf16.mxu0 0
        %2278 = vmatpush1.bf16.msra.mxu0 %v2270
        %2279 = vmatprep.subr.bf16.mxu0 0
        %2280 = vmatpush1.bf16.msra.mxu0 %v2271
        %2281 = vmatprep.subr.bf16.mxu0 0
        %2282 = vmatpush1.bf16.msra.mxu0 0
        %2283 = vmatprep.subr.bf16.mxu0 0
        %2284 = vmatpush1.bf16.msra.mxu0 0
        %2285 = vmatprep.subr.bf16.mxu0 0
        %2286 = vmatpush1.bf16.msra.mxu0 0
        %2287 = vmatprep.subr.bf16.mxu0 0
        %2288 = vmatpush1.bf16.msra.mxu0 0
        %2289 = vmatprep.subr.bf16.mxu0 0
        %2290 = vmatpush1.bf16.msra.mxu0 0
        %2291 = vmatprep.subr.bf16.mxu0 0
        %2292 = vmatpush1.bf16.msra.mxu0 0
        %2293 = vmatprep.subr.bf16.mxu0 0
        %2294 = vmatpush1.bf16.msra.mxu0 0
        %2295 = vmatprep.subr.bf16.mxu0 0
        %2296 = vmatpush1.bf16.msra.mxu0 0
        %2297 = vmatprep.subr.bf16.mxu0 0
        %2298 = vmatpush1.bf16.msra.mxu0 0
        %2299 = vmatprep.subr.bf16.mxu0 0
        %2300 = vmatpush1.bf16.msra.mxu0 0
        %2301 = vmatprep.subr.bf16.mxu0 0
        %2302 = vmatpush1.bf16.msra.mxu0 0
        %2303 = vmatprep.subr.bf16.mxu0 0
        %2304 = vmatpush1.bf16.msra.mxu0 0
        %2305 = vmatprep.subr.bf16.mxu0 0
        %2306 = vmatpush1.bf16.msra.mxu0 0
        %2307 = vmatprep.subr.bf16.mxu0 0
        %2308 = vmatpush1.bf16.msra.mxu0 0
        %2309 = vmatprep.mubr.bf16.mxu0 0
        %2310 = vmatmul.mubr.bf16.gmra.mrb[0].mxu0 %v2275
        %v2311 = vpop.f32.mrb[0].mxu0
        %v2312 = vadd.f32 0.0, %v2311
        %v2313 = vpop.f32.mrb[0].mxu0
        %v2314 = vpop.f32.mrb[0].mxu0
        %v2315 = vpop.f32.mrb[0].mxu0
        %2316 = vdwg.mxu0
        %v2321 = vunpack.c.l.b16 %v2148
        %v2322 = vunpack.c.l.b16 %v2149
        %v2323 = vunpack.c.l.b16 %v2150
        %v2324 = vunpack.c.l.b16 %v2151
        %v2325 = vpack.c.b16 %v2322, %v2321
        %v2326 = vpack.c.b16 %v2324, %v2323
        %v2330 = vsel %vm1713, %v2135, 0
        %2332 = vmatprep.subr.bf16.mxu0 0
        %2333 = vmatpush1.bf16.msra.mxu0 %v2325
        %2334 = vmatprep.subr.bf16.mxu0 0
        %2335 = vmatpush1.bf16.msra.mxu0 %v2326
        %2336 = vmatprep.subr.bf16.mxu0 0
        %2337 = vmatpush1.bf16.msra.mxu0 0
        %2338 = vmatprep.subr.bf16.mxu0 0
        %2339 = vmatpush1.bf16.msra.mxu0 0
        %2340 = vmatprep.subr.bf16.mxu0 0
        %2341 = vmatpush1.bf16.msra.mxu0 0
        %2342 = vmatprep.subr.bf16.mxu0 0
        %2343 = vmatpush1.bf16.msra.mxu0 0
        %2344 = vmatprep.subr.bf16.mxu0 0
        %2345 = vmatpush1.bf16.msra.mxu0 0
        %2346 = vmatprep.subr.bf16.mxu0 0
        %2347 = vmatpush1.bf16.msra.mxu0 0
        %2348 = vmatprep.subr.bf16.mxu0 0
        %2349 = vmatpush1.bf16.msra.mxu0 0
        %2350 = vmatprep.subr.bf16.mxu0 0
        %2351 = vmatpush1.bf16.msra.mxu0 0
        %2352 = vmatprep.subr.bf16.mxu0 0
        %2353 = vmatpush1.bf16.msra.mxu0 0
        %2354 = vmatprep.subr.bf16.mxu0 0
        %2355 = vmatpush1.bf16.msra.mxu0 0
        %2356 = vmatprep.subr.bf16.mxu0 0
        %2357 = vmatpush1.bf16.msra.mxu0 0
        %2358 = vmatprep.subr.bf16.mxu0 0
        %2359 = vmatpush1.bf16.msra.mxu0 0
        %2360 = vmatprep.subr.bf16.mxu0 0
        %2361 = vmatpush1.bf16.msra.mxu0 0
        %2362 = vmatprep.subr.bf16.mxu0 0
        %2363 = vmatpush1.bf16.msra.mxu0 0
        %2364 = vmatprep.mubr.bf16.mxu0 0
        %2365 = vmatmul.mubr.bf16.gmra.mrb[0].mxu0 %v2330
        %v2366 = vpop.f32.mrb[0].mxu0
        %v2367 = vadd.f32 0.0, %v2366
        %v2368 = vpop.f32.mrb[0].mxu0
        %v2369 = vpop.f32.mrb[0].mxu0
        %v2370 = vpop.f32.mrb[0].mxu0
        %2371 = vdwg.mxu0
        %v2372 = vadd.f32 %v2202, %v2257
        %v2373 = vadd.f32 %v2372, %v2312
        %v2374 = vadd.f32 %v2373, %v2367
        %v2375 = vld [vmem:[%s6] sm:$0x1]
        %v2377 = vlaneseq
        %v2378 = vshrl.u32 %v2377, 7
        %v2379 = vsub.s32 0, %v2378
        %v2380 = vrot.slane %v2375, %v2379
        %v2382 = vadd.f32 %v2374, %v2380
        %2383 = vst [vmem:[%s317] sm:$0xff] %v2382
        %s2384 = sand.u32 %s207, 1
        %s2385 = scalar_lea.sflag [#allocation5], %s2384
        %s2386 = sand.u32 %s207, 1
        %s2387 = smul.addr %s2386, 8
        %s2388 = scalar_lea.vmem [#allocation4], %s2387
        // Predicated region
        $region53: #{tpu_custom_call.1} parent=47 // pred_check
          %p2389 = pneg %p217
        $region54: #{tpu_custom_call.1} parent=47 // pred_check_branch
          %2391 = sbr.rel (%p2389) target = $region56
        $region55: #{tpu_custom_call.1} parent=47 // pred_region
          %s2393 = ssub.s32 128, 128
          %2394 = vsyncadd %s2385, %s2393
          %s2395 = sadd.s32 %s26, %s25
          %s2396 = smul.addr %s2395, 128
          %s2397 = scalar_lea.hbm %s7, %s2396
          %s2399 = sshll.u32 %s2388, 4
          %s2400 = int_to_ptr.vmem [resolvable:$true] %s2399
          %2402 = dma.vmem_to_hbm [thread:$0]  %s2400, 128, %s2397, %s2385
        $region56: #{tpu_custom_call.1} parent=47 // pred_fallthru
          _
      $region48: #{tpu_custom_call.1} parent=5 // pred_fallthru
        _
      %p2403 = scmp.le.s32.totalorder 2, %s16
      // Predicated region
      $region57: #{tpu_custom_call.1} parent=5 // pred_check
        %p2404 = pneg %p2403
      $region58: #{tpu_custom_call.1} parent=5 // pred_check_branch
        %2406 = sbr.rel (%p2404) target = $region60
      $region59: #{tpu_custom_call.1} parent=5 // pred_region
        %s2407 = ssub.s32 %s16, 2
        // Predicated region
        $region61: #{tpu_custom_call.1} parent=59 // pred_check
          %p2408 = pneg %p223
        $region62: #{tpu_custom_call.1} parent=59 // pred_check_branch
          %2410 = sbr.rel (%p2408) target = $region64
        $region63: #{tpu_custom_call.1} parent=59 // pred_region
          %s2411 = sand.u32 %s208, 1
          %s2412 = scalar_lea.sflag [#allocation5], %s2411
          %s2413 = sand.u32 %s208, 1
          %s2414 = smul.addr %s2413, 8
          %s2415 = scalar_lea.vmem [#allocation4], %s2414
          %2416 = dma.done %s2412, 128
        $region64: #{tpu_custom_call.1} parent=59 // pred_fallthru
          _
      $region60: #{tpu_custom_call.1} parent=5 // pred_fallthru
        _
    $region6: #{tpu_custom_call.1} parent=1 // loop_footer
      %s20 = sadd.s32 1, %s16
    $region7: #{tpu_custom_call.1} parent=1 // loop_footer_branch
      %15 = sbr.rel target = $region3
    $region8: #{tpu_custom_call.1} parent=1 // loop_exit
      _
    %2417 = vsyncpa [#allocation5], 1
    %s2418 = scalar_lea.sflag [#allocation5], 1
    %2419 = vsyncpa %s2418, 1

</llo_original>
